<compile_context>
chip_gen: v6e
topology: v6e:2x2x1
jax: 0.10.0
libtpu: 0.0.40
codegen_flags: <defaults>
</compile_context>

<pallas_src>
import jax
import jax.numpy as jnp
from jax import lax
from jax.experimental import pallas as pl
from jax.experimental.pallas import tpu as pltpu


# ---------------------------------------------------------------------------
# Fused Pallas kernel: attention (all heads) + output projection + bias
# ---------------------------------------------------------------------------

def make_fused_mulatt_kernel(S, D, head, scale, mxu_dtype):
    Dh = D // head
    qkt_dims = (((2,), (2,)), ((0,), (0,)))    # (B,S,Dh) x (B,S,Dh) -> (B,S,S)
    pv_dims = (((2,), (1,)), ((0,), (0,)))     # (B,S,S)  x (B,S,Dh) -> (B,S,Dh)
    proj_dims = (((2,), (0,)), ((), ()))       # (B,S,D)  x (D,D)    -> (B,S,D)

    def kernel(qkv_ref, w_ref, b_ref, o_ref):
        # Whole problem resident in VMEM (single invocation, no grid).
        q = qkv_ref[0] * scale                 # (B,S,D); fold 1/sqrt(dim) once
        k = qkv_ref[1]
        v = qkv_ref[2]
        w = w_ref[...].astype(mxu_dtype)       # (D, D) = w_o.T, (in, out) layout

        # softmax_masker: key index j > head  ->  -1e6 (same mask for all rows)
        col = lax.broadcasted_iota(jnp.int32, (1, S, S), 2)
        key_mask = col > head

        att_heads = []
        for h in range(head):                  # static unroll over heads
            lo = h * Dh
            qh = lax.slice_in_dim(q, lo, lo + Dh, axis=2).astype(mxu_dtype)
            kh = lax.slice_in_dim(k, lo, lo + Dh, axis=2).astype(mxu_dtype)
            vh = lax.slice_in_dim(v, lo, lo + Dh, axis=2).astype(mxu_dtype)

            # score = (qh/sqrt(dim)) @ kh^T   (batched over B, no materialized .T)
            score = lax.dot_general(qh, kh, qkt_dims,
                                    preferred_element_type=jnp.float32)
            score = jnp.where(key_mask, jnp.float32(-1e6), score)

            # numerically-stable softmax, all math in f32, exact normalization
            score = score - jnp.max(score, axis=-1, keepdims=True)
            p = jnp.exp(score)
            denom = jnp.sum(p, axis=-1, keepdims=True)
            p = p * pl.reciprocal(denom, approx=False)

            att_heads.append(lax.dot_general(
                p.astype(mxu_dtype), vh, pv_dims,
                preferred_element_type=jnp.float32))         # (B, S, Dh)

        # Concatenate heads along lanes and do ONE fused output projection.
        att_cat = jnp.concatenate(att_heads, axis=-1).astype(mxu_dtype)  # (B,S,D)
        out = lax.dot_general(att_cat, w, proj_dims,
                              preferred_element_type=jnp.float32)        # (B,S,D)

        # Single lane/sublane-dense store of the whole result slab.
        o_ref[...] = (out + b_ref[...]).astype(o_ref.dtype)

    return kernel


# ---------------------------------------------------------------------------
# Wrapper
# ---------------------------------------------------------------------------

def mul_att_forward(K, V, Q, head, w_o, b_o, scale_dim, mxu_dtype=jnp.float32):
    """Fused MulAtt forward.  Pass mxu_dtype=jnp.bfloat16 on v6e/v7x at
    production sizes to halve MXU passes; softmax math stays f32 regardless."""
    B, S, D = Q.shape
    assert D % head == 0
    scale = 1.0 / (float(scale_dim) ** 0.5)

    # One input slab -> one DMA descriptor for Q/K/V.
    qkv = jnp.stack([Q, K, V], axis=0)         # (3, B, S, D)
    w_o_t = w_o.T                              # (in, out): MXU-natural layout
    b2 = b_o.reshape(1, D)

    vmem = pltpu.MemorySpace.VMEM
    return pl.pallas_call(
        make_fused_mulatt_kernel(S, D, head, scale, mxu_dtype),
        out_shape=jax.ShapeDtypeStruct((B, S, D), jnp.float32),
        in_specs=[pl.BlockSpec(memory_space=vmem),
                  pl.BlockSpec(memory_space=vmem),
                  pl.BlockSpec(memory_space=vmem)],
        out_specs=pl.BlockSpec(memory_space=vmem),
    )(qkv, w_o_t, b2)


# ---------------------------------------------------------------------------
# Pure-JAX reference (for correctness check)
# ---------------------------------------------------------------------------

def transpose_qkv(x, num_heads):
    B, S, D = x.shape
    x = x.reshape(B, S, num_heads, D // num_heads)
    x = jnp.transpose(x, (0, 2, 1, 3))
    return x.reshape(B * num_heads, S, D // num_heads)


def transpose_out(x, num_heads):
    BH, S, Dh = x.shape
    B = BH // num_heads
    x = x.reshape(B, num_heads, S, Dh)
    x = jnp.transpose(x, (0, 2, 1, 3))
    return x.reshape(B, S, num_heads * Dh)


def reference(K, V, Q, head, w_o, b_o, scale_dim):
    hp = lax.Precision.HIGHEST
    tq = transpose_qkv(Q, head)
    tk = transpose_qkv(K, head)
    tv = transpose_qkv(V, head)
    score = jnp.einsum("bqd,bkd->bqk", tq, tk, precision=hp) / (float(scale_dim) ** 0.5)
    S = score.shape[-1]
    col = jnp.arange(S)
    score = jnp.where(col[None, None, :] > head, jnp.float32(-1e6), score)
    p = jax.nn.softmax(score, axis=-1)
    att = jnp.einsum("bqk,bkd->bqd", p, tv, precision=hp)
    out_cat = transpose_out(att, head)
    return jnp.einsum("bsd,od->bso", out_cat, w_o, precision=hp) + b_o


# ---------------------------------------------------------------------------
# Main
# ---------------------------------------------------------------------------

if __name__ == "__main__":
    batch, seq_len, dim, head = 2, 8, 32, 4
    num_hidden = dim  # forward() requires w_o input dim == concat-head dim

    key = jax.random.PRNGKey(0)
    kK, kV, kQ, kW, kB = jax.random.split(key, 5)
    K = jax.random.uniform(kK, (batch, seq_len, dim), jnp.float32)
    V = jax.random.uniform(kV, (batch, seq_len, dim), jnp.float32)
    Q = jax.random.uniform(kQ, (batch, seq_len, dim), jnp.float32)

    # nn.Linear-style deterministic init for w_o (w_q/w_k/w_v unused by forward)
    bound = 1.0 / (num_hidden ** 0.5)
    w_o = jax.random.uniform(kW, (num_hidden, num_hidden), jnp.float32,
                             minval=-bound, maxval=bound)
    b_o = jax.random.uniform(kB, (num_hidden,), jnp.float32,
                             minval=-bound, maxval=bound)

    out = mul_att_forward(K, V, Q, head, w_o, b_o, scale_dim=dim)
    out = jax.block_until_ready(out)

    ref = reference(K, V, Q, head, w_o, b_o, dim)
    assert out.shape == (batch, seq_len, dim)
    # f32 MXU operands + exact softmax reciprocal -> tight parity with the
    # high-precision reference (structural errors would be O(0.1)).
    assert jnp.allclose(out, ref, atol=1e-3, rtol=1e-3), "kernel/reference mismatch"

    print("KERNEL_OK")
</pallas_src>

<mosaic_0001>
module attributes {stable_mosaic.version = 11 : i64} {
  func.func @kernel(%arg0: memref<3x2x8x32xf32, #tpu.memory_space<vmem>>, %arg1: memref<32x32xf32, #tpu.memory_space<vmem>>, %arg2: memref<1x32xf32, #tpu.memory_space<vmem>>, %arg3: memref<2x8x32xf32, #tpu.memory_space<vmem>>) attributes {dimension_semantics = [], scalar_prefetch = 0 : i64, scratch_operands = 0 : i64, tpu.core_type = #tpu.core_type<tc>} {
    %c0 = arith.constant 0 : index
    %c0_0 = arith.constant 0 : index
    %c0_1 = arith.constant 0 : index
    %c0_2 = arith.constant 0 : index
    %0 = vector.load %arg0[%c0, %c0_0, %c0_1, %c0_2] : memref<3x2x8x32xf32, #tpu.memory_space<vmem>>, vector<1x2x8x32xf32>
    %1 = vector.shape_cast %0 : vector<1x2x8x32xf32> to vector<2x8x32xf32>
    %cst = arith.constant 0.176776692 : f32
    %2 = vector.broadcast %cst : f32 to vector<2x8x32xf32>
    %3 = arith.mulf %1, %2 : vector<2x8x32xf32>
    %c1 = arith.constant 1 : index
    %c0_3 = arith.constant 0 : index
    %c0_4 = arith.constant 0 : index
    %c0_5 = arith.constant 0 : index
    %4 = vector.load %arg0[%c1, %c0_3, %c0_4, %c0_5] : memref<3x2x8x32xf32, #tpu.memory_space<vmem>>, vector<1x2x8x32xf32>
    %5 = vector.shape_cast %4 : vector<1x2x8x32xf32> to vector<2x8x32xf32>
    %c2 = arith.constant 2 : index
    %c0_6 = arith.constant 0 : index
    %c0_7 = arith.constant 0 : index
    %c0_8 = arith.constant 0 : index
    %6 = vector.load %arg0[%c2, %c0_6, %c0_7, %c0_8] : memref<3x2x8x32xf32, #tpu.memory_space<vmem>>, vector<1x2x8x32xf32>
    %7 = vector.shape_cast %6 : vector<1x2x8x32xf32> to vector<2x8x32xf32>
    %c0_9 = arith.constant 0 : index
    %c0_10 = arith.constant 0 : index
    %8 = vector.load %arg1[%c0_9, %c0_10] : memref<32x32xf32, #tpu.memory_space<vmem>>, vector<32x32xf32>
    %9 = tpu.iota {dimensions = array<i32: 2>} : vector<1x8x8xi32>
    %c4_i32 = arith.constant 4 : i32
    %10 = vector.broadcast %c4_i32 : i32 to vector<1x8x8xi32>
    %11 = arith.cmpi sgt, %9, %10 : vector<1x8x8xi32>
    %12 = vector.extract_strided_slice %3 {offsets = [0, 0, 0], sizes = [2, 8, 8], strides = [1, 1, 1]} : vector<2x8x32xf32> to vector<2x8x8xf32>
    %13 = vector.extract_strided_slice %5 {offsets = [0, 0, 0], sizes = [2, 8, 8], strides = [1, 1, 1]} : vector<2x8x32xf32> to vector<2x8x8xf32>
    %14 = vector.extract_strided_slice %7 {offsets = [0, 0, 0], sizes = [2, 8, 8], strides = [1, 1, 1]} : vector<2x8x32xf32> to vector<2x8x8xf32>
    %cst_11 = arith.constant dense<0.000000e+00> : vector<2x8x8xf32>
    %15 = tpu.matmul %12, %13, %cst_11 {dimension_numbers = #tpu.dot_dimension_numbers<[2], [2], [1], [1], [0, 0, 0, 1, 1, 1], [0], [0]>} : vector<2x8x8xf32>, vector<2x8x8xf32>, vector<2x8x8xf32> -> vector<2x8x8xf32>
    %cst_12 = arith.constant -1.000000e+06 : f32
    %16 = vector.shape_cast %11 : vector<1x8x8xi1> to vector<1x8x8xi1>
    %17 = vector.broadcast %16 : vector<1x8x8xi1> to vector<2x8x8xi1>
    %18 = vector.broadcast %cst_12 : f32 to vector<2x8x8xf32>
    %19 = arith.select %17, %18, %15 : vector<2x8x8xi1>, vector<2x8x8xf32>
    %cst_13 = arith.constant dense<0xFF800000> : vector<2x8xf32>
    %20 = vector.multi_reduction <maximumf>, %19, %cst_13 [2] : vector<2x8x8xf32> to vector<2x8xf32>
    %21 = vector.shape_cast %20 : vector<2x8xf32> to vector<2x8x1xf32>
    %22 = vector.broadcast %21 : vector<2x8x1xf32> to vector<2x8x8xf32>
    %23 = arith.subf %19, %22 : vector<2x8x8xf32>
    %24 = math.exp %23 : vector<2x8x8xf32>
    %cst_14 = arith.constant dense<0.000000e+00> : vector<2x8xf32>
    %25 = vector.multi_reduction <add>, %24, %cst_14 [2] : vector<2x8x8xf32> to vector<2x8xf32>
    %26 = vector.shape_cast %25 : vector<2x8xf32> to vector<2x8x1xf32>
    %27 = tpu.reciprocal %26 : vector<2x8x1xf32> -> vector<2x8x1xf32>
    %28 = vector.broadcast %27 : vector<2x8x1xf32> to vector<2x8x8xf32>
    %29 = arith.mulf %24, %28 : vector<2x8x8xf32>
    %cst_15 = arith.constant dense<0.000000e+00> : vector<2x8x8xf32>
    %30 = tpu.matmul %29, %14, %cst_15 {dimension_numbers = #tpu.dot_dimension_numbers<[2], [1], [1], [2], [0, 0, 0, 1, 1, 2], [0], [0]>} : vector<2x8x8xf32>, vector<2x8x8xf32>, vector<2x8x8xf32> -> vector<2x8x8xf32>
    %31 = vector.extract_strided_slice %3 {offsets = [0, 0, 8], sizes = [2, 8, 8], strides = [1, 1, 1]} : vector<2x8x32xf32> to vector<2x8x8xf32>
    %32 = vector.extract_strided_slice %5 {offsets = [0, 0, 8], sizes = [2, 8, 8], strides = [1, 1, 1]} : vector<2x8x32xf32> to vector<2x8x8xf32>
    %33 = vector.extract_strided_slice %7 {offsets = [0, 0, 8], sizes = [2, 8, 8], strides = [1, 1, 1]} : vector<2x8x32xf32> to vector<2x8x8xf32>
    %cst_16 = arith.constant dense<0.000000e+00> : vector<2x8x8xf32>
    %34 = tpu.matmul %31, %32, %cst_16 {dimension_numbers = #tpu.dot_dimension_numbers<[2], [2], [1], [1], [0, 0, 0, 1, 1, 1], [0], [0]>} : vector<2x8x8xf32>, vector<2x8x8xf32>, vector<2x8x8xf32> -> vector<2x8x8xf32>
    %cst_17 = arith.constant -1.000000e+06 : f32
    %35 = vector.shape_cast %11 : vector<1x8x8xi1> to vector<1x8x8xi1>
    %36 = vector.broadcast %35 : vector<1x8x8xi1> to vector<2x8x8xi1>
    %37 = vector.broadcast %cst_17 : f32 to vector<2x8x8xf32>
    %38 = arith.select %36, %37, %34 : vector<2x8x8xi1>, vector<2x8x8xf32>
    %cst_18 = arith.constant dense<0xFF800000> : vector<2x8xf32>
    %39 = vector.multi_reduction <maximumf>, %38, %cst_18 [2] : vector<2x8x8xf32> to vector<2x8xf32>
    %40 = vector.shape_cast %39 : vector<2x8xf32> to vector<2x8x1xf32>
    %41 = vector.broadcast %40 : vector<2x8x1xf32> to vector<2x8x8xf32>
    %42 = arith.subf %38, %41 : vector<2x8x8xf32>
    %43 = math.exp %42 : vector<2x8x8xf32>
    %cst_19 = arith.constant dense<0.000000e+00> : vector<2x8xf32>
    %44 = vector.multi_reduction <add>, %43, %cst_19 [2] : vector<2x8x8xf32> to vector<2x8xf32>
    %45 = vector.shape_cast %44 : vector<2x8xf32> to vector<2x8x1xf32>
    %46 = tpu.reciprocal %45 : vector<2x8x1xf32> -> vector<2x8x1xf32>
    %47 = vector.broadcast %46 : vector<2x8x1xf32> to vector<2x8x8xf32>
    %48 = arith.mulf %43, %47 : vector<2x8x8xf32>
    %cst_20 = arith.constant dense<0.000000e+00> : vector<2x8x8xf32>
    %49 = tpu.matmul %48, %33, %cst_20 {dimension_numbers = #tpu.dot_dimension_numbers<[2], [1], [1], [2], [0, 0, 0, 1, 1, 2], [0], [0]>} : vector<2x8x8xf32>, vector<2x8x8xf32>, vector<2x8x8xf32> -> vector<2x8x8xf32>
    %50 = vector.extract_strided_slice %3 {offsets = [0, 0, 16], sizes = [2, 8, 8], strides = [1, 1, 1]} : vector<2x8x32xf32> to vector<2x8x8xf32>
    %51 = vector.extract_strided_slice %5 {offsets = [0, 0, 16], sizes = [2, 8, 8], strides = [1, 1, 1]} : vector<2x8x32xf32> to vector<2x8x8xf32>
    %52 = vector.extract_strided_slice %7 {offsets = [0, 0, 16], sizes = [2, 8, 8], strides = [1, 1, 1]} : vector<2x8x32xf32> to vector<2x8x8xf32>
    %cst_21 = arith.constant dense<0.000000e+00> : vector<2x8x8xf32>
    %53 = tpu.matmul %50, %51, %cst_21 {dimension_numbers = #tpu.dot_dimension_numbers<[2], [2], [1], [1], [0, 0, 0, 1, 1, 1], [0], [0]>} : vector<2x8x8xf32>, vector<2x8x8xf32>, vector<2x8x8xf32> -> vector<2x8x8xf32>
    %cst_22 = arith.constant -1.000000e+06 : f32
    %54 = vector.shape_cast %11 : vector<1x8x8xi1> to vector<1x8x8xi1>
    %55 = vector.broadcast %54 : vector<1x8x8xi1> to vector<2x8x8xi1>
    %56 = vector.broadcast %cst_22 : f32 to vector<2x8x8xf32>
    %57 = arith.select %55, %56, %53 : vector<2x8x8xi1>, vector<2x8x8xf32>
    %cst_23 = arith.constant dense<0xFF800000> : vector<2x8xf32>
    %58 = vector.multi_reduction <maximumf>, %57, %cst_23 [2] : vector<2x8x8xf32> to vector<2x8xf32>
    %59 = vector.shape_cast %58 : vector<2x8xf32> to vector<2x8x1xf32>
    %60 = vector.broadcast %59 : vector<2x8x1xf32> to vector<2x8x8xf32>
    %61 = arith.subf %57, %60 : vector<2x8x8xf32>
    %62 = math.exp %61 : vector<2x8x8xf32>
    %cst_24 = arith.constant dense<0.000000e+00> : vector<2x8xf32>
    %63 = vector.multi_reduction <add>, %62, %cst_24 [2] : vector<2x8x8xf32> to vector<2x8xf32>
    %64 = vector.shape_cast %63 : vector<2x8xf32> to vector<2x8x1xf32>
    %65 = tpu.reciprocal %64 : vector<2x8x1xf32> -> vector<2x8x1xf32>
    %66 = vector.broadcast %65 : vector<2x8x1xf32> to vector<2x8x8xf32>
    %67 = arith.mulf %62, %66 : vector<2x8x8xf32>
    %cst_25 = arith.constant dense<0.000000e+00> : vector<2x8x8xf32>
    %68 = tpu.matmul %67, %52, %cst_25 {dimension_numbers = #tpu.dot_dimension_numbers<[2], [1], [1], [2], [0, 0, 0, 1, 1, 2], [0], [0]>} : vector<2x8x8xf32>, vector<2x8x8xf32>, vector<2x8x8xf32> -> vector<2x8x8xf32>
    %69 = vector.extract_strided_slice %3 {offsets = [0, 0, 24], sizes = [2, 8, 8], strides = [1, 1, 1]} : vector<2x8x32xf32> to vector<2x8x8xf32>
    %70 = vector.extract_strided_slice %5 {offsets = [0, 0, 24], sizes = [2, 8, 8], strides = [1, 1, 1]} : vector<2x8x32xf32> to vector<2x8x8xf32>
    %71 = vector.extract_strided_slice %7 {offsets = [0, 0, 24], sizes = [2, 8, 8], strides = [1, 1, 1]} : vector<2x8x32xf32> to vector<2x8x8xf32>
    %cst_26 = arith.constant dense<0.000000e+00> : vector<2x8x8xf32>
    %72 = tpu.matmul %69, %70, %cst_26 {dimension_numbers = #tpu.dot_dimension_numbers<[2], [2], [1], [1], [0, 0, 0, 1, 1, 1], [0], [0]>} : vector<2x8x8xf32>, vector<2x8x8xf32>, vector<2x8x8xf32> -> vector<2x8x8xf32>
    %cst_27 = arith.constant -1.000000e+06 : f32
    %73 = vector.shape_cast %11 : vector<1x8x8xi1> to vector<1x8x8xi1>
    %74 = vector.broadcast %73 : vector<1x8x8xi1> to vector<2x8x8xi1>
    %75 = vector.broadcast %cst_27 : f32 to vector<2x8x8xf32>
    %76 = arith.select %74, %75, %72 : vector<2x8x8xi1>, vector<2x8x8xf32>
    %cst_28 = arith.constant dense<0xFF800000> : vector<2x8xf32>
    %77 = vector.multi_reduction <maximumf>, %76, %cst_28 [2] : vector<2x8x8xf32> to vector<2x8xf32>
    %78 = vector.shape_cast %77 : vector<2x8xf32> to vector<2x8x1xf32>
    %79 = vector.broadcast %78 : vector<2x8x1xf32> to vector<2x8x8xf32>
    %80 = arith.subf %76, %79 : vector<2x8x8xf32>
    %81 = math.exp %80 : vector<2x8x8xf32>
    %cst_29 = arith.constant dense<0.000000e+00> : vector<2x8xf32>
    %82 = vector.multi_reduction <add>, %81, %cst_29 [2] : vector<2x8x8xf32> to vector<2x8xf32>
    %83 = vector.shape_cast %82 : vector<2x8xf32> to vector<2x8x1xf32>
    %84 = tpu.reciprocal %83 : vector<2x8x1xf32> -> vector<2x8x1xf32>
    %85 = vector.broadcast %84 : vector<2x8x1xf32> to vector<2x8x8xf32>
    %86 = arith.mulf %81, %85 : vector<2x8x8xf32>
    %cst_30 = arith.constant dense<0.000000e+00> : vector<2x8x8xf32>
    %87 = tpu.matmul %86, %71, %cst_30 {dimension_numbers = #tpu.dot_dimension_numbers<[2], [1], [1], [2], [0, 0, 0, 1, 1, 2], [0], [0]>} : vector<2x8x8xf32>, vector<2x8x8xf32>, vector<2x8x8xf32> -> vector<2x8x8xf32>
    %88 = tpu.concatenate %30, %49, %68, %87 in 2 : vector<2x8x8xf32>, vector<2x8x8xf32>, vector<2x8x8xf32>, vector<2x8x8xf32> -> vector<2x8x32xf32>
    %cst_31 = arith.constant dense<0.000000e+00> : vector<2x8x32xf32>
    %89 = tpu.matmul %88, %8, %cst_31 {dimension_numbers = #tpu.dot_dimension_numbers<[2], [0], [0, 1], [1], [0, 0, 0, 1, 1, 1], [], []>} : vector<2x8x32xf32>, vector<32x32xf32>, vector<2x8x32xf32> -> vector<2x8x32xf32>
    %c0_32 = arith.constant 0 : index
    %c0_33 = arith.constant 0 : index
    %90 = vector.load %arg2[%c0_32, %c0_33] : memref<1x32xf32, #tpu.memory_space<vmem>>, vector<1x32xf32>
    %91 = vector.shape_cast %90 : vector<1x32xf32> to vector<1x1x32xf32>
    %92 = vector.broadcast %91 : vector<1x1x32xf32> to vector<2x8x32xf32>
    %93 = arith.addf %89, %92 : vector<2x8x32xf32>
    %c0_34 = arith.constant 0 : index
    %c0_35 = arith.constant 0 : index
    %c0_36 = arith.constant 0 : index
    %94 = vector.load %arg3[%c0_34, %c0_35, %c0_36] : memref<2x8x32xf32, #tpu.memory_space<vmem>>, vector<2x8x32xf32>
    tpu.vector_store %arg3[%c0_34, %c0_35, %c0_36], %93 {strides = array<i32>} : memref<2x8x32xf32, #tpu.memory_space<vmem>>, vector<2x8x32xf32>,
    return
  }
}

</mosaic_0001>

<llo_original>
// kernel: tpu_custom_call.1
$region0: #{tpu_custom_call.1}
  #allocation0 [shape = 'u32[]', space=smem, size = 0x4, offset = 0x4, fixed_abs, tag = 'smem constant byte address 0x4 - core index']
  #allocation1 [shape = 'u32[144,128]{1,0:T(1,128)}', space=vmem, size = 0x12000, scoped, tag = 'internal scratch']
  %s0 = inlined_call_operand.hbm [shape: f32[3,2,8,32], index: 0, kind: input, shape index: {}]
  %s1 = inlined_call_operand.hbm [shape: f32[32,32], index: 1, kind: input, shape index: {}]
  %s2 = inlined_call_operand.vmem [shape: f32[1,32], index: 2, kind: input, shape index: {}]
  %s3 = inlined_call_operand.hbm [shape: f32[2,8,32], index: 3, kind: output, shape index: {}]
  %s4 = sld [smem:[#allocation0]]
  $region30: #{tpu_custom_call.1} parent=0
    _
  %s6 = ssub.s32 1, %s4
  %s7 = scalar_select 0, %s6, %s4
  $region1: #{tpu_custom_call.1} parent=0
    #allocation2 [shape = 'u8[24576]{0}', space=vmem, size = 0x6000, scoped, tag = 'input window, operand 0, single buffered']
    #allocation3 [shape = 's32[1]{0}', space=sflag, size = 0x4, scoped, tag = 'scoped memory for tpu_custom_call.1']
    #allocation4 [shape = 's32[1]{0}', space=sflag, size = 0x4, scoped, tag = 'scoped memory for tpu_custom_call.1']
    #allocation5 [shape = 'u8[16384]{0}', space=vmem, size = 0x4000, scoped, tag = 'input window, operand 1, single buffered']
    #allocation6 [shape = 's32[1]{0}', space=sflag, size = 0x4, scoped, tag = 'scoped memory for tpu_custom_call.1']
    #allocation7 [shape = 'u8[8192]{0}', space=vmem, size = 0x2000, scoped, tag = 'output window, operand 0, single buffered']
    %8 = vsyncpa [#allocation3], 0
    %9 = vsyncpa [#allocation6], 0
    %10 = vsyncpa [#allocation4], 0
    // Predicated region
    $region2: #{tpu_custom_call.1} parent=1 // pred_check
      _
    $region3: #{tpu_custom_call.1} parent=1 // pred_check_branch
      %12 = sbr.rel (0) target = $region5
    $region4: #{tpu_custom_call.1} parent=1 // pred_region
      %s14 = ssub.s32 768, 768
      %15 = vsyncadd [#allocation3], %s14
      %s16 = sshll.u32 [#allocation2], 4
      %s17 = int_to_ptr.vmem [resolvable:$true] %s16
      %22 = dma.hbm_to_vmem [thread:$0]  %s0, 768, %s17, [#allocation3], 128, 128, 8
    $region5: #{tpu_custom_call.1} parent=1 // pred_fallthru
      _
    // Predicated region
    $region6: #{tpu_custom_call.1} parent=1 // pred_check
      _
    $region7: #{tpu_custom_call.1} parent=1 // pred_check_branch
      %24 = sbr.rel (0) target = $region9
    $region8: #{tpu_custom_call.1} parent=1 // pred_region
      %s26 = ssub.s32 512, 512
      %27 = vsyncadd [#allocation6], %s26
      %s28 = sshll.u32 [#allocation5], 4
      %s29 = int_to_ptr.vmem [resolvable:$true] %s28
      %34 = dma.hbm_to_vmem [thread:$0]  %s1, 512, %s29, [#allocation6], 128, 128, 8
    $region9: #{tpu_custom_call.1} parent=1 // pred_fallthru
      _
    // Predicated region
    $region10: #{tpu_custom_call.1} parent=1 // pred_check
      _
    $region11: #{tpu_custom_call.1} parent=1 // pred_check_branch
      %36 = sbr.rel (0) target = $region13
    $region12: #{tpu_custom_call.1} parent=1 // pred_region
      _
    $region13: #{tpu_custom_call.1} parent=1 // pred_fallthru
      _
    // Predicated region
    $region14: #{tpu_custom_call.1} parent=1 // pred_check
      _
    $region15: #{tpu_custom_call.1} parent=1 // pred_check_branch
      %38 = sbr.rel (0) target = $region17
    $region16: #{tpu_custom_call.1} parent=1 // pred_region
      %39 = dma.done [#allocation3], 768
    $region17: #{tpu_custom_call.1} parent=1 // pred_fallthru
      _
    // Predicated region
    $region18: #{tpu_custom_call.1} parent=1 // pred_check
      _
    $region19: #{tpu_custom_call.1} parent=1 // pred_check_branch
      %41 = sbr.rel (0) target = $region21
    $region20: #{tpu_custom_call.1} parent=1 // pred_region
      %42 = dma.done [#allocation6], 512
    $region21: #{tpu_custom_call.1} parent=1 // pred_fallthru
      _
    %v43 = vld [vmem:[#allocation2] sm:$0xff]
    %v44 = vld [vmem:[#allocation2 + $0x8] sm:$0xff]
    %v45 = vmul.f32 %v43, 0.17677669
    %v46 = vmul.f32 %v44, 0.17677669
    %s47 = scalar_lea.vmem [#allocation2], 16
    %v48 = vld [vmem:[%s47] sm:$0xff]
    %v49 = vld [vmem:[%s47 + $0x8] sm:$0xff]
    %s50 = scalar_lea.vmem [#allocation2], 32
    %v51 = vld [vmem:[%s50] sm:$0xff]
    %v52 = vld [vmem:[%s50 + $0x8] sm:$0xff]
    %v53 = vld [vmem:[#allocation5] sm:$0xff]
    %v54 = vld [vmem:[#allocation5 + $0x8] sm:$0xff]
    %v55 = vld [vmem:[#allocation5 + $0x10] sm:$0xff]
    %v56 = vld [vmem:[#allocation5 + $0x18] sm:$0xff]
    %v57 = vlaneseq
    %v58 = vand.u32 %v57, 127
    %vm59 = vcmp.gt.s32.totalorder %v58, 4
    %vm60 = vcmask 64512
    %v62 = vsel %vm60, %v45, 0
    %v65 = vsel %vm60, %v48, 0
    %67 = vmatprep.subr.mxu0 0.0
    %68 = vmatpush1.xpose.msra.mxu0 0.0
    %69 = vmatprep.subr.mxu0 0.0
    %70 = vmatpush1.xpose.msra.mxu0 0.0
    %71 = vmatprep.subr.mxu0 0.0
    %72 = vmatpush1.xpose.msra.mxu0 0.0
    %73 = vmatprep.subr.mxu0 0.0
    %74 = vmatpush1.xpose.msra.mxu0 0.0
    %75 = vmatprep.subr.mxu0 0.0
    %76 = vmatpush1.xpose.msra.mxu0 0.0
    %77 = vmatprep.subr.mxu0 0.0
    %78 = vmatpush1.xpose.msra.mxu0 0.0
    %79 = vmatprep.subr.mxu0 0.0
    %80 = vmatpush1.xpose.msra.mxu0 0.0
    %81 = vmatprep.subr.mxu0 0.0
    %82 = vmatpush1.xpose.msra.mxu0 0.0
    %83 = vmatprep.subr.mxu0 0.0
    %84 = vmatpush1.xpose.msra.mxu0 0.0
    %85 = vmatprep.subr.mxu0 0.0
    %86 = vmatpush1.xpose.msra.mxu0 0.0
    %87 = vmatprep.subr.mxu0 0.0
    %88 = vmatpush1.xpose.msra.mxu0 0.0
    %89 = vmatprep.subr.mxu0 0.0
    %90 = vmatpush1.xpose.msra.mxu0 0.0
    %91 = vmatprep.subr.mxu0 0.0
    %92 = vmatpush1.xpose.msra.mxu0 0.0
    %93 = vmatprep.subr.mxu0 0.0
    %94 = vmatpush1.xpose.msra.mxu0 0.0
    %95 = vmatprep.subr.mxu0 0.0
    %96 = vmatpush1.xpose.msra.mxu0 0.0
    %97 = vmatprep.subr.mxu0 0.0
    %98 = vmatpush1.xpose.msra.mxu0 %v65
    %99 = vmatprep.subr.mxu0 0.0
    %100 = vmatpush2.xpose.msra.mxu0 0.0
    %101 = vmatprep.subr.mxu0 0.0
    %102 = vmatpush2.xpose.msra.mxu0 0.0
    %103 = vmatprep.subr.mxu0 0.0
    %104 = vmatpush2.xpose.msra.mxu0 0.0
    %105 = vmatprep.subr.mxu0 0.0
    %106 = vmatpush2.xpose.msra.mxu0 0.0
    %107 = vmatprep.subr.mxu0 0.0
    %108 = vmatpush2.xpose.msra.mxu0 0.0
    %109 = vmatprep.subr.mxu0 0.0
    %110 = vmatpush2.xpose.msra.mxu0 0.0
    %111 = vmatprep.subr.mxu0 0.0
    %112 = vmatpush2.xpose.msra.mxu0 0.0
    %113 = vmatprep.subr.mxu0 0.0
    %114 = vmatpush2.xpose.msra.mxu0 0.0
    %115 = vmatprep.subr.mxu0 0.0
    %116 = vmatpush2.xpose.msra.mxu0 0.0
    %117 = vmatprep.subr.mxu0 0.0
    %118 = vmatpush2.xpose.msra.mxu0 0.0
    %119 = vmatprep.subr.mxu0 0.0
    %120 = vmatpush2.xpose.msra.mxu0 0.0
    %121 = vmatprep.subr.mxu0 0.0
    %122 = vmatpush2.xpose.msra.mxu0 0.0
    %123 = vmatprep.subr.mxu0 0.0
    %124 = vmatpush2.xpose.msra.mxu0 0.0
    %125 = vmatprep.subr.mxu0 0.0
    %126 = vmatpush2.xpose.msra.mxu0 0.0
    %127 = vmatprep.subr.mxu0 0.0
    %128 = vmatpush2.xpose.msra.mxu0 0.0
    %129 = vmatprep.subr.mxu0 0.0
    %130 = vmatpush2.xpose.msra.mxu0 0.0
    %131 = vmatprep.mubr.f32.mxu0 0.0
    %132 = vmatmul.mubr.f32.gmra.mxu0 %v62
    %v133 = vpop.f32.mrf.mxu0
    %v134 = vadd.f32 0.0, %v133
    %v135 = vpop.f32.mrf.mxu0
    %136 = vdwg.mxu0
    %v138 = vsel %vm60, %v46, 0
    %v141 = vsel %vm60, %v49, 0
    %143 = vmatprep.subr.mxu0 0.0
    %144 = vmatpush1.xpose.msra.mxu0 0.0
    %145 = vmatprep.subr.mxu0 0.0
    %146 = vmatpush1.xpose.msra.mxu0 0.0
    %147 = vmatprep.subr.mxu0 0.0
    %148 = vmatpush1.xpose.msra.mxu0 0.0
    %149 = vmatprep.subr.mxu0 0.0
    %150 = vmatpush1.xpose.msra.mxu0 0.0
    %151 = vmatprep.subr.mxu0 0.0
    %152 = vmatpush1.xpose.msra.mxu0 0.0
    %153 = vmatprep.subr.mxu0 0.0
    %154 = vmatpush1.xpose.msra.mxu0 0.0
    %155 = vmatprep.subr.mxu0 0.0
    %156 = vmatpush1.xpose.msra.mxu0 0.0
    %157 = vmatprep.subr.mxu0 0.0
    %158 = vmatpush1.xpose.msra.mxu0 0.0
    %159 = vmatprep.subr.mxu0 0.0
    %160 = vmatpush1.xpose.msra.mxu0 0.0
    %161 = vmatprep.subr.mxu0 0.0
    %162 = vmatpush1.xpose.msra.mxu0 0.0
    %163 = vmatprep.subr.mxu0 0.0
    %164 = vmatpush1.xpose.msra.mxu0 0.0
    %165 = vmatprep.subr.mxu0 0.0
    %166 = vmatpush1.xpose.msra.mxu0 0.0
    %167 = vmatprep.subr.mxu0 0.0
    %168 = vmatpush1.xpose.msra.mxu0 0.0
    %169 = vmatprep.subr.mxu0 0.0
    %170 = vmatpush1.xpose.msra.mxu0 0.0
    %171 = vmatprep.subr.mxu0 0.0
    %172 = vmatpush1.xpose.msra.mxu0 0.0
    %173 = vmatprep.subr.mxu0 0.0
    %174 = vmatpush1.xpose.msra.mxu0 %v141
    %175 = vmatprep.subr.mxu0 0.0
    %176 = vmatpush2.xpose.msra.mxu0 0.0
    %177 = vmatprep.subr.mxu0 0.0
    %178 = vmatpush2.xpose.msra.mxu0 0.0
    %179 = vmatprep.subr.mxu0 0.0
    %180 = vmatpush2.xpose.msra.mxu0 0.0
    %181 = vmatprep.subr.mxu0 0.0
    %182 = vmatpush2.xpose.msra.mxu0 0.0
    %183 = vmatprep.subr.mxu0 0.0
    %184 = vmatpush2.xpose.msra.mxu0 0.0
    %185 = vmatprep.subr.mxu0 0.0
    %186 = vmatpush2.xpose.msra.mxu0 0.0
    %187 = vmatprep.subr.mxu0 0.0
    %188 = vmatpush2.xpose.msra.mxu0 0.0
    %189 = vmatprep.subr.mxu0 0.0
    %190 = vmatpush2.xpose.msra.mxu0 0.0
    %191 = vmatprep.subr.mxu0 0.0
    %192 = vmatpush2.xpose.msra.mxu0 0.0
    %193 = vmatprep.subr.mxu0 0.0
    %194 = vmatpush2.xpose.msra.mxu0 0.0
    %195 = vmatprep.subr.mxu0 0.0
    %196 = vmatpush2.xpose.msra.mxu0 0.0
    %197 = vmatprep.subr.mxu0 0.0
    %198 = vmatpush2.xpose.msra.mxu0 0.0
    %199 = vmatprep.subr.mxu0 0.0
    %200 = vmatpush2.xpose.msra.mxu0 0.0
    %201 = vmatprep.subr.mxu0 0.0
    %202 = vmatpush2.xpose.msra.mxu0 0.0
    %203 = vmatprep.subr.mxu0 0.0
    %204 = vmatpush2.xpose.msra.mxu0 0.0
    %205 = vmatprep.subr.mxu0 0.0
    %206 = vmatpush2.xpose.msra.mxu0 0.0
    %207 = vmatprep.mubr.f32.mxu0 0.0
    %208 = vmatmul.mubr.f32.gmra.mxu0 %v138
    %v209 = vpop.f32.mrf.mxu0
    %v210 = vadd.f32 0.0, %v209
    %v211 = vpop.f32.mrf.mxu0
    %212 = vdwg.mxu0
    %v213 = vsel %vm59, 1, 0
    %vm214 = vcmp.eq.s32.totalorder %v213, 1
    %v215 = vsel %vm214, -1000000.0, %v134
    %v216 = vsel %vm214, -1000000.0, %v210
    %v217 = vsel %vm60, %v215, -inf
    %218 = vmax.xlane.f32.xlu0 %v217
    %v219 = vpop.xlane.xlu0 %218
    %v220 = vsel %vm60, %v216, -inf
    %221 = vmax.xlane.f32.xlu0 %v220
    %v222 = vpop.xlane.xlu0 %221
    %v223 = vsub.f32 %v215, %v219
    %v224 = vsub.f32 %v216, %v222
    %v225 = vmul.f32 %v223, 1.442695
    %v226 = vpow.pop %v225
    %v227 = vmul.f32 %v224, 1.442695
    %v228 = vpow.pop %v227
    %v229 = vsel %vm60, %v226, 0.0
    %230 = vadd.xlane.f32.xlu0 %v229
    %v231 = vpop.xlane.xlu0 %230
    %v232 = vsel %vm60, %v228, 0.0
    %233 = vadd.xlane.f32.xlu0 %v232
    %v234 = vpop.xlane.xlu0 %233
    %v235 = vrcp.pop %v231
    %v236 = vrcp.pop %v234
    %v237 = vmul.f32 %v226, %v235
    %v238 = vmul.f32 %v228, %v236
    %v240 = vsel %vm60, %v237, 0
    %242 = vmatprep.subr.mxu0 0.0
    %243 = vmatpush1.msra.mxu0 0.0
    %244 = vmatprep.subr.mxu0 0.0
    %245 = vmatpush1.msra.mxu0 0.0
    %246 = vmatprep.subr.mxu0 0.0
    %247 = vmatpush1.msra.mxu0 0.0
    %248 = vmatprep.subr.mxu0 0.0
    %249 = vmatpush1.msra.mxu0 0.0
    %250 = vmatprep.subr.mxu0 0.0
    %251 = vmatpush1.msra.mxu0 0.0
    %252 = vmatprep.subr.mxu0 0.0
    %253 = vmatpush1.msra.mxu0 0.0
    %254 = vmatprep.subr.mxu0 0.0
    %255 = vmatpush1.msra.mxu0 0.0
    %256 = vmatprep.subr.mxu0 0.0
    %257 = vmatpush1.msra.mxu0 0.0
    %258 = vmatprep.subr.mxu0 0.0
    %259 = vmatpush1.msra.mxu0 0.0
    %260 = vmatprep.subr.mxu0 0.0
    %261 = vmatpush1.msra.mxu0 0.0
    %262 = vmatprep.subr.mxu0 0.0
    %263 = vmatpush1.msra.mxu0 0.0
    %264 = vmatprep.subr.mxu0 0.0
    %265 = vmatpush1.msra.mxu0 0.0
    %266 = vmatprep.subr.mxu0 0.0
    %267 = vmatpush1.msra.mxu0 0.0
    %268 = vmatprep.subr.mxu0 0.0
    %269 = vmatpush1.msra.mxu0 0.0
    %270 = vmatprep.subr.mxu0 0.0
    %271 = vmatpush1.msra.mxu0 0.0
    %272 = vmatprep.subr.mxu0 0.0
    %273 = vmatpush1.msra.mxu0 %v51
    %274 = vmatprep.subr.mxu0 0.0
    %275 = vmatpush2.msra.mxu0 0.0
    %276 = vmatprep.subr.mxu0 0.0
    %277 = vmatpush2.msra.mxu0 0.0
    %278 = vmatprep.subr.mxu0 0.0
    %279 = vmatpush2.msra.mxu0 0.0
    %280 = vmatprep.subr.mxu0 0.0
    %281 = vmatpush2.msra.mxu0 0.0
    %282 = vmatprep.subr.mxu0 0.0
    %283 = vmatpush2.msra.mxu0 0.0
    %284 = vmatprep.subr.mxu0 0.0
    %285 = vmatpush2.msra.mxu0 0.0
    %286 = vmatprep.subr.mxu0 0.0
    %287 = vmatpush2.msra.mxu0 0.0
    %288 = vmatprep.subr.mxu0 0.0
    %289 = vmatpush2.msra.mxu0 0.0
    %290 = vmatprep.subr.mxu0 0.0
    %291 = vmatpush2.msra.mxu0 0.0
    %292 = vmatprep.subr.mxu0 0.0
    %293 = vmatpush2.msra.mxu0 0.0
    %294 = vmatprep.subr.mxu0 0.0
    %295 = vmatpush2.msra.mxu0 0.0
    %296 = vmatprep.subr.mxu0 0.0
    %297 = vmatpush2.msra.mxu0 0.0
    %298 = vmatprep.subr.mxu0 0.0
    %299 = vmatpush2.msra.mxu0 0.0
    %300 = vmatprep.subr.mxu0 0.0
    %301 = vmatpush2.msra.mxu0 0.0
    %302 = vmatprep.subr.mxu0 0.0
    %303 = vmatpush2.msra.mxu0 0.0
    %304 = vmatprep.subr.mxu0 0.0
    %305 = vmatpush2.msra.mxu0 0.0
    %306 = vmatprep.mubr.f32.mxu0 0.0
    %307 = vmatmul.mubr.f32.gmra.mxu0 %v240
    %v308 = vpop.f32.mrf.mxu0
    %v309 = vadd.f32 0.0, %v308
    %v310 = vpop.f32.mrf.mxu0
    %311 = vdwg.mxu0
    %v313 = vsel %vm60, %v238, 0
    %315 = vmatprep.subr.mxu0 0.0
    %316 = vmatpush1.msra.mxu0 0.0
    %317 = vmatprep.subr.mxu0 0.0
    %318 = vmatpush1.msra.mxu0 0.0
    %319 = vmatprep.subr.mxu0 0.0
    %320 = vmatpush1.msra.mxu0 0.0
    %321 = vmatprep.subr.mxu0 0.0
    %322 = vmatpush1.msra.mxu0 0.0
    %323 = vmatprep.subr.mxu0 0.0
    %324 = vmatpush1.msra.mxu0 0.0
    %325 = vmatprep.subr.mxu0 0.0
    %326 = vmatpush1.msra.mxu0 0.0
    %327 = vmatprep.subr.mxu0 0.0
    %328 = vmatpush1.msra.mxu0 0.0
    %329 = vmatprep.subr.mxu0 0.0
    %330 = vmatpush1.msra.mxu0 0.0
    %331 = vmatprep.subr.mxu0 0.0
    %332 = vmatpush1.msra.mxu0 0.0
    %333 = vmatprep.subr.mxu0 0.0
    %334 = vmatpush1.msra.mxu0 0.0
    %335 = vmatprep.subr.mxu0 0.0
    %336 = vmatpush1.msra.mxu0 0.0
    %337 = vmatprep.subr.mxu0 0.0
    %338 = vmatpush1.msra.mxu0 0.0
    %339 = vmatprep.subr.mxu0 0.0
    %340 = vmatpush1.msra.mxu0 0.0
    %341 = vmatprep.subr.mxu0 0.0
    %342 = vmatpush1.msra.mxu0 0.0
    %343 = vmatprep.subr.mxu0 0.0
    %344 = vmatpush1.msra.mxu0 0.0
    %345 = vmatprep.subr.mxu0 0.0
    %346 = vmatpush1.msra.mxu0 %v52
    %347 = vmatprep.subr.mxu0 0.0
    %348 = vmatpush2.msra.mxu0 0.0
    %349 = vmatprep.subr.mxu0 0.0
    %350 = vmatpush2.msra.mxu0 0.0
    %351 = vmatprep.subr.mxu0 0.0
    %352 = vmatpush2.msra.mxu0 0.0
    %353 = vmatprep.subr.mxu0 0.0
    %354 = vmatpush2.msra.mxu0 0.0
    %355 = vmatprep.subr.mxu0 0.0
    %356 = vmatpush2.msra.mxu0 0.0
    %357 = vmatprep.subr.mxu0 0.0
    %358 = vmatpush2.msra.mxu0 0.0
    %359 = vmatprep.subr.mxu0 0.0
    %360 = vmatpush2.msra.mxu0 0.0
    %361 = vmatprep.subr.mxu0 0.0
    %362 = vmatpush2.msra.mxu0 0.0
    %363 = vmatprep.subr.mxu0 0.0
    %364 = vmatpush2.msra.mxu0 0.0
    %365 = vmatprep.subr.mxu0 0.0
    %366 = vmatpush2.msra.mxu0 0.0
    %367 = vmatprep.subr.mxu0 0.0
    %368 = vmatpush2.msra.mxu0 0.0
    %369 = vmatprep.subr.mxu0 0.0
    %370 = vmatpush2.msra.mxu0 0.0
    %371 = vmatprep.subr.mxu0 0.0
    %372 = vmatpush2.msra.mxu0 0.0
    %373 = vmatprep.subr.mxu0 0.0
    %374 = vmatpush2.msra.mxu0 0.0
    %375 = vmatprep.subr.mxu0 0.0
    %376 = vmatpush2.msra.mxu0 0.0
    %377 = vmatprep.subr.mxu0 0.0
    %378 = vmatpush2.msra.mxu0 0.0
    %379 = vmatprep.mubr.f32.mxu0 0.0
    %380 = vmatmul.mubr.f32.gmra.mxu0 %v313
    %v381 = vpop.f32.mrf.mxu0
    %v382 = vadd.f32 0.0, %v381
    %v383 = vpop.f32.mrf.mxu0
    %384 = vdwg.mxu0
    %385 = vrot.lane.b32.xlu0 %v45, 120
    %v386 = vpop.permute.xlu0 %385
    %387 = vrot.lane.b32.xlu0 %v48, 120
    %v388 = vpop.permute.xlu0 %387
    %v389 = vsel %vm60, %v386, 0
    %v391 = vsel %vm60, %v388, 0
    %393 = vmatprep.subr.mxu0 0.0
    %394 = vmatpush1.xpose.msra.mxu0 0.0
    %395 = vmatprep.subr.mxu0 0.0
    %396 = vmatpush1.xpose.msra.mxu0 0.0
    %397 = vmatprep.subr.mxu0 0.0
    %398 = vmatpush1.xpose.msra.mxu0 0.0
    %399 = vmatprep.subr.mxu0 0.0
    %400 = vmatpush1.xpose.msra.mxu0 0.0
    %401 = vmatprep.subr.mxu0 0.0
    %402 = vmatpush1.xpose.msra.mxu0 0.0
    %403 = vmatprep.subr.mxu0 0.0
    %404 = vmatpush1.xpose.msra.mxu0 0.0
    %405 = vmatprep.subr.mxu0 0.0
    %406 = vmatpush1.xpose.msra.mxu0 0.0
    %407 = vmatprep.subr.mxu0 0.0
    %408 = vmatpush1.xpose.msra.mxu0 0.0
    %409 = vmatprep.subr.mxu0 0.0
    %410 = vmatpush1.xpose.msra.mxu0 0.0
    %411 = vmatprep.subr.mxu0 0.0
    %412 = vmatpush1.xpose.msra.mxu0 0.0
    %413 = vmatprep.subr.mxu0 0.0
    %414 = vmatpush1.xpose.msra.mxu0 0.0
    %415 = vmatprep.subr.mxu0 0.0
    %416 = vmatpush1.xpose.msra.mxu0 0.0
    %417 = vmatprep.subr.mxu0 0.0
    %418 = vmatpush1.xpose.msra.mxu0 0.0
    %419 = vmatprep.subr.mxu0 0.0
    %420 = vmatpush1.xpose.msra.mxu0 0.0
    %421 = vmatprep.subr.mxu0 0.0
    %422 = vmatpush1.xpose.msra.mxu0 0.0
    %423 = vmatprep.subr.mxu0 0.0
    %424 = vmatpush1.xpose.msra.mxu0 %v391
    %425 = vmatprep.subr.mxu0 0.0
    %426 = vmatpush2.xpose.msra.mxu0 0.0
    %427 = vmatprep.subr.mxu0 0.0
    %428 = vmatpush2.xpose.msra.mxu0 0.0
    %429 = vmatprep.subr.mxu0 0.0
    %430 = vmatpush2.xpose.msra.mxu0 0.0
    %431 = vmatprep.subr.mxu0 0.0
    %432 = vmatpush2.xpose.msra.mxu0 0.0
    %433 = vmatprep.subr.mxu0 0.0
    %434 = vmatpush2.xpose.msra.mxu0 0.0
    %435 = vmatprep.subr.mxu0 0.0
    %436 = vmatpush2.xpose.msra.mxu0 0.0
    %437 = vmatprep.subr.mxu0 0.0
    %438 = vmatpush2.xpose.msra.mxu0 0.0
    %439 = vmatprep.subr.mxu0 0.0
    %440 = vmatpush2.xpose.msra.mxu0 0.0
    %441 = vmatprep.subr.mxu0 0.0
    %442 = vmatpush2.xpose.msra.mxu0 0.0
    %443 = vmatprep.subr.mxu0 0.0
    %444 = vmatpush2.xpose.msra.mxu0 0.0
    %445 = vmatprep.subr.mxu0 0.0
    %446 = vmatpush2.xpose.msra.mxu0 0.0
    %447 = vmatprep.subr.mxu0 0.0
    %448 = vmatpush2.xpose.msra.mxu0 0.0
    %449 = vmatprep.subr.mxu0 0.0
    %450 = vmatpush2.xpose.msra.mxu0 0.0
    %451 = vmatprep.subr.mxu0 0.0
    %452 = vmatpush2.xpose.msra.mxu0 0.0
    %453 = vmatprep.subr.mxu0 0.0
    %454 = vmatpush2.xpose.msra.mxu0 0.0
    %455 = vmatprep.subr.mxu0 0.0
    %456 = vmatpush2.xpose.msra.mxu0 0.0
    %457 = vmatprep.mubr.f32.mxu0 0.0
    %458 = vmatmul.mubr.f32.gmra.mxu0 %v389
    %v459 = vpop.f32.mrf.mxu0
    %v460 = vadd.f32 0.0, %v459
    %v461 = vpop.f32.mrf.mxu0
    %462 = vdwg.mxu0
    %463 = vrot.lane.b32.xlu0 %v46, 120
    %v464 = vpop.permute.xlu0 %463
    %465 = vrot.lane.b32.xlu0 %v49, 120
    %v466 = vpop.permute.xlu0 %465
    %v467 = vsel %vm60, %v464, 0
    %v469 = vsel %vm60, %v466, 0
    %471 = vmatprep.subr.mxu0 0.0
    %472 = vmatpush1.xpose.msra.mxu0 0.0
    %473 = vmatprep.subr.mxu0 0.0
    %474 = vmatpush1.xpose.msra.mxu0 0.0
    %475 = vmatprep.subr.mxu0 0.0
    %476 = vmatpush1.xpose.msra.mxu0 0.0
    %477 = vmatprep.subr.mxu0 0.0
    %478 = vmatpush1.xpose.msra.mxu0 0.0
    %479 = vmatprep.subr.mxu0 0.0
    %480 = vmatpush1.xpose.msra.mxu0 0.0
    %481 = vmatprep.subr.mxu0 0.0
    %482 = vmatpush1.xpose.msra.mxu0 0.0
    %483 = vmatprep.subr.mxu0 0.0
    %484 = vmatpush1.xpose.msra.mxu0 0.0
    %485 = vmatprep.subr.mxu0 0.0
    %486 = vmatpush1.xpose.msra.mxu0 0.0
    %487 = vmatprep.subr.mxu0 0.0
    %488 = vmatpush1.xpose.msra.mxu0 0.0
    %489 = vmatprep.subr.mxu0 0.0
    %490 = vmatpush1.xpose.msra.mxu0 0.0
    %491 = vmatprep.subr.mxu0 0.0
    %492 = vmatpush1.xpose.msra.mxu0 0.0
    %493 = vmatprep.subr.mxu0 0.0
    %494 = vmatpush1.xpose.msra.mxu0 0.0
    %495 = vmatprep.subr.mxu0 0.0
    %496 = vmatpush1.xpose.msra.mxu0 0.0
    %497 = vmatprep.subr.mxu0 0.0
    %498 = vmatpush1.xpose.msra.mxu0 0.0
    %499 = vmatprep.subr.mxu0 0.0
    %500 = vmatpush1.xpose.msra.mxu0 0.0
    %501 = vmatprep.subr.mxu0 0.0
    %502 = vmatpush1.xpose.msra.mxu0 %v469
    %503 = vmatprep.subr.mxu0 0.0
    %504 = vmatpush2.xpose.msra.mxu0 0.0
    %505 = vmatprep.subr.mxu0 0.0
    %506 = vmatpush2.xpose.msra.mxu0 0.0
    %507 = vmatprep.subr.mxu0 0.0
    %508 = vmatpush2.xpose.msra.mxu0 0.0
    %509 = vmatprep.subr.mxu0 0.0
    %510 = vmatpush2.xpose.msra.mxu0 0.0
    %511 = vmatprep.subr.mxu0 0.0
    %512 = vmatpush2.xpose.msra.mxu0 0.0
    %513 = vmatprep.subr.mxu0 0.0
    %514 = vmatpush2.xpose.msra.mxu0 0.0
    %515 = vmatprep.subr.mxu0 0.0
    %516 = vmatpush2.xpose.msra.mxu0 0.0
    %517 = vmatprep.subr.mxu0 0.0
    %518 = vmatpush2.xpose.msra.mxu0 0.0
    %519 = vmatprep.subr.mxu0 0.0
    %520 = vmatpush2.xpose.msra.mxu0 0.0
    %521 = vmatprep.subr.mxu0 0.0
    %522 = vmatpush2.xpose.msra.mxu0 0.0
    %523 = vmatprep.subr.mxu0 0.0
    %524 = vmatpush2.xpose.msra.mxu0 0.0
    %525 = vmatprep.subr.mxu0 0.0
    %526 = vmatpush2.xpose.msra.mxu0 0.0
    %527 = vmatprep.subr.mxu0 0.0
    %528 = vmatpush2.xpose.msra.mxu0 0.0
    %529 = vmatprep.subr.mxu0 0.0
    %530 = vmatpush2.xpose.msra.mxu0 0.0
    %531 = vmatprep.subr.mxu0 0.0
    %532 = vmatpush2.xpose.msra.mxu0 0.0
    %533 = vmatprep.subr.mxu0 0.0
    %534 = vmatpush2.xpose.msra.mxu0 0.0
    %535 = vmatprep.mubr.f32.mxu0 0.0
    %536 = vmatmul.mubr.f32.gmra.mxu0 %v467
    %v537 = vpop.f32.mrf.mxu0
    %v538 = vadd.f32 0.0, %v537
    %v539 = vpop.f32.mrf.mxu0
    %540 = vdwg.mxu0
    %v541 = vsel %vm214, -1000000.0, %v460
    %v542 = vsel %vm214, -1000000.0, %v538
    %v543 = vsel %vm60, %v541, -inf
    %544 = vmax.xlane.f32.xlu0 %v543
    %v545 = vpop.xlane.xlu0 %544
    %v546 = vsel %vm60, %v542, -inf
    %547 = vmax.xlane.f32.xlu0 %v546
    %v548 = vpop.xlane.xlu0 %547
    %v549 = vsub.f32 %v541, %v545
    %v550 = vsub.f32 %v542, %v548
    %v551 = vmul.f32 %v549, 1.442695
    %v552 = vpow.pop %v551
    %v553 = vmul.f32 %v550, 1.442695
    %v554 = vpow.pop %v553
    %v555 = vsel %vm60, %v552, 0.0
    %556 = vadd.xlane.f32.xlu0 %v555
    %v557 = vpop.xlane.xlu0 %556
    %v558 = vsel %vm60, %v554, 0.0
    %559 = vadd.xlane.f32.xlu0 %v558
    %v560 = vpop.xlane.xlu0 %559
    %v561 = vrcp.pop %v557
    %v562 = vrcp.pop %v560
    %v563 = vmul.f32 %v552, %v561
    %v564 = vmul.f32 %v554, %v562
    %566 = vrot.lane.b32.xlu0 %v51, 120
    %v567 = vpop.permute.xlu0 %566
    %v570 = vsel %vm60, %v563, 0
    %572 = vmatprep.subr.mxu0 0.0
    %573 = vmatpush1.msra.mxu0 0.0
    %574 = vmatprep.subr.mxu0 0.0
    %575 = vmatpush1.msra.mxu0 0.0
    %576 = vmatprep.subr.mxu0 0.0
    %577 = vmatpush1.msra.mxu0 0.0
    %578 = vmatprep.subr.mxu0 0.0
    %579 = vmatpush1.msra.mxu0 0.0
    %580 = vmatprep.subr.mxu0 0.0
    %581 = vmatpush1.msra.mxu0 0.0
    %582 = vmatprep.subr.mxu0 0.0
    %583 = vmatpush1.msra.mxu0 0.0
    %584 = vmatprep.subr.mxu0 0.0
    %585 = vmatpush1.msra.mxu0 0.0
    %586 = vmatprep.subr.mxu0 0.0
    %587 = vmatpush1.msra.mxu0 0.0
    %588 = vmatprep.subr.mxu0 0.0
    %589 = vmatpush1.msra.mxu0 0.0
    %590 = vmatprep.subr.mxu0 0.0
    %591 = vmatpush1.msra.mxu0 0.0
    %592 = vmatprep.subr.mxu0 0.0
    %593 = vmatpush1.msra.mxu0 0.0
    %594 = vmatprep.subr.mxu0 0.0
    %595 = vmatpush1.msra.mxu0 0.0
    %596 = vmatprep.subr.mxu0 0.0
    %597 = vmatpush1.msra.mxu0 0.0
    %598 = vmatprep.subr.mxu0 0.0
    %599 = vmatpush1.msra.mxu0 0.0
    %600 = vmatprep.subr.mxu0 0.0
    %601 = vmatpush1.msra.mxu0 0.0
    %602 = vmatprep.subr.mxu0 0.0
    %603 = vmatpush1.msra.mxu0 %v567
    %604 = vmatprep.subr.mxu0 0.0
    %605 = vmatpush2.msra.mxu0 0.0
    %606 = vmatprep.subr.mxu0 0.0
    %607 = vmatpush2.msra.mxu0 0.0
    %608 = vmatprep.subr.mxu0 0.0
    %609 = vmatpush2.msra.mxu0 0.0
    %610 = vmatprep.subr.mxu0 0.0
    %611 = vmatpush2.msra.mxu0 0.0
    %612 = vmatprep.subr.mxu0 0.0
    %613 = vmatpush2.msra.mxu0 0.0
    %614 = vmatprep.subr.mxu0 0.0
    %615 = vmatpush2.msra.mxu0 0.0
    %616 = vmatprep.subr.mxu0 0.0
    %617 = vmatpush2.msra.mxu0 0.0
    %618 = vmatprep.subr.mxu0 0.0
    %619 = vmatpush2.msra.mxu0 0.0
    %620 = vmatprep.subr.mxu0 0.0
    %621 = vmatpush2.msra.mxu0 0.0
    %622 = vmatprep.subr.mxu0 0.0
    %623 = vmatpush2.msra.mxu0 0.0
    %624 = vmatprep.subr.mxu0 0.0
    %625 = vmatpush2.msra.mxu0 0.0
    %626 = vmatprep.subr.mxu0 0.0
    %627 = vmatpush2.msra.mxu0 0.0
    %628 = vmatprep.subr.mxu0 0.0
    %629 = vmatpush2.msra.mxu0 0.0
    %630 = vmatprep.subr.mxu0 0.0
    %631 = vmatpush2.msra.mxu0 0.0
    %632 = vmatprep.subr.mxu0 0.0
    %633 = vmatpush2.msra.mxu0 0.0
    %634 = vmatprep.subr.mxu0 0.0
    %635 = vmatpush2.msra.mxu0 0.0
    %636 = vmatprep.mubr.f32.mxu0 0.0
    %637 = vmatmul.mubr.f32.gmra.mxu0 %v570
    %v638 = vpop.f32.mrf.mxu0
    %v639 = vadd.f32 0.0, %v638
    %v640 = vpop.f32.mrf.mxu0
    %641 = vdwg.mxu0
    %643 = vrot.lane.b32.xlu0 %v52, 120
    %v644 = vpop.permute.xlu0 %643
    %v647 = vsel %vm60, %v564, 0
    %649 = vmatprep.subr.mxu0 0.0
    %650 = vmatpush1.msra.mxu0 0.0
    %651 = vmatprep.subr.mxu0 0.0
    %652 = vmatpush1.msra.mxu0 0.0
    %653 = vmatprep.subr.mxu0 0.0
    %654 = vmatpush1.msra.mxu0 0.0
    %655 = vmatprep.subr.mxu0 0.0
    %656 = vmatpush1.msra.mxu0 0.0
    %657 = vmatprep.subr.mxu0 0.0
    %658 = vmatpush1.msra.mxu0 0.0
    %659 = vmatprep.subr.mxu0 0.0
    %660 = vmatpush1.msra.mxu0 0.0
    %661 = vmatprep.subr.mxu0 0.0
    %662 = vmatpush1.msra.mxu0 0.0
    %663 = vmatprep.subr.mxu0 0.0
    %664 = vmatpush1.msra.mxu0 0.0
    %665 = vmatprep.subr.mxu0 0.0
    %666 = vmatpush1.msra.mxu0 0.0
    %667 = vmatprep.subr.mxu0 0.0
    %668 = vmatpush1.msra.mxu0 0.0
    %669 = vmatprep.subr.mxu0 0.0
    %670 = vmatpush1.msra.mxu0 0.0
    %671 = vmatprep.subr.mxu0 0.0
    %672 = vmatpush1.msra.mxu0 0.0
    %673 = vmatprep.subr.mxu0 0.0
    %674 = vmatpush1.msra.mxu0 0.0
    %675 = vmatprep.subr.mxu0 0.0
    %676 = vmatpush1.msra.mxu0 0.0
    %677 = vmatprep.subr.mxu0 0.0
    %678 = vmatpush1.msra.mxu0 0.0
    %679 = vmatprep.subr.mxu0 0.0
    %680 = vmatpush1.msra.mxu0 %v644
    %681 = vmatprep.subr.mxu0 0.0
    %682 = vmatpush2.msra.mxu0 0.0
    %683 = vmatprep.subr.mxu0 0.0
    %684 = vmatpush2.msra.mxu0 0.0
    %685 = vmatprep.subr.mxu0 0.0
    %686 = vmatpush2.msra.mxu0 0.0
    %687 = vmatprep.subr.mxu0 0.0
    %688 = vmatpush2.msra.mxu0 0.0
    %689 = vmatprep.subr.mxu0 0.0
    %690 = vmatpush2.msra.mxu0 0.0
    %691 = vmatprep.subr.mxu0 0.0
    %692 = vmatpush2.msra.mxu0 0.0
    %693 = vmatprep.subr.mxu0 0.0
    %694 = vmatpush2.msra.mxu0 0.0
    %695 = vmatprep.subr.mxu0 0.0
    %696 = vmatpush2.msra.mxu0 0.0
    %697 = vmatprep.subr.mxu0 0.0
    %698 = vmatpush2.msra.mxu0 0.0
    %699 = vmatprep.subr.mxu0 0.0
    %700 = vmatpush2.msra.mxu0 0.0
    %701 = vmatprep.subr.mxu0 0.0
    %702 = vmatpush2.msra.mxu0 0.0
    %703 = vmatprep.subr.mxu0 0.0
    %704 = vmatpush2.msra.mxu0 0.0
    %705 = vmatprep.subr.mxu0 0.0
    %706 = vmatpush2.msra.mxu0 0.0
    %707 = vmatprep.subr.mxu0 0.0
    %708 = vmatpush2.msra.mxu0 0.0
    %709 = vmatprep.subr.mxu0 0.0
    %710 = vmatpush2.msra.mxu0 0.0
    %711 = vmatprep.subr.mxu0 0.0
    %712 = vmatpush2.msra.mxu0 0.0
    %713 = vmatprep.mubr.f32.mxu0 0.0
    %714 = vmatmul.mubr.f32.gmra.mxu0 %v647
    %v715 = vpop.f32.mrf.mxu0
    %v716 = vadd.f32 0.0, %v715
    %v717 = vpop.f32.mrf.mxu0
    %718 = vdwg.mxu0
    %719 = vrot.lane.b32.xlu0 %v45, 112
    %v720 = vpop.permute.xlu0 %719
    %721 = vrot.lane.b32.xlu0 %v48, 112
    %v722 = vpop.permute.xlu0 %721
    %v723 = vsel %vm60, %v720, 0
    %v725 = vsel %vm60, %v722, 0
    %727 = vmatprep.subr.mxu0 0.0
    %728 = vmatpush1.xpose.msra.mxu0 0.0
    %729 = vmatprep.subr.mxu0 0.0
    %730 = vmatpush1.xpose.msra.mxu0 0.0
    %731 = vmatprep.subr.mxu0 0.0
    %732 = vmatpush1.xpose.msra.mxu0 0.0
    %733 = vmatprep.subr.mxu0 0.0
    %734 = vmatpush1.xpose.msra.mxu0 0.0
    %735 = vmatprep.subr.mxu0 0.0
    %736 = vmatpush1.xpose.msra.mxu0 0.0
    %737 = vmatprep.subr.mxu0 0.0
    %738 = vmatpush1.xpose.msra.mxu0 0.0
    %739 = vmatprep.subr.mxu0 0.0
    %740 = vmatpush1.xpose.msra.mxu0 0.0
    %741 = vmatprep.subr.mxu0 0.0
    %742 = vmatpush1.xpose.msra.mxu0 0.0
    %743 = vmatprep.subr.mxu0 0.0
    %744 = vmatpush1.xpose.msra.mxu0 0.0
    %745 = vmatprep.subr.mxu0 0.0
    %746 = vmatpush1.xpose.msra.mxu0 0.0
    %747 = vmatprep.subr.mxu0 0.0
    %748 = vmatpush1.xpose.msra.mxu0 0.0
    %749 = vmatprep.subr.mxu0 0.0
    %750 = vmatpush1.xpose.msra.mxu0 0.0
    %751 = vmatprep.subr.mxu0 0.0
    %752 = vmatpush1.xpose.msra.mxu0 0.0
    %753 = vmatprep.subr.mxu0 0.0
    %754 = vmatpush1.xpose.msra.mxu0 0.0
    %755 = vmatprep.subr.mxu0 0.0
    %756 = vmatpush1.xpose.msra.mxu0 0.0
    %757 = vmatprep.subr.mxu0 0.0
    %758 = vmatpush1.xpose.msra.mxu0 %v725
    %759 = vmatprep.subr.mxu0 0.0
    %760 = vmatpush2.xpose.msra.mxu0 0.0
    %761 = vmatprep.subr.mxu0 0.0
    %762 = vmatpush2.xpose.msra.mxu0 0.0
    %763 = vmatprep.subr.mxu0 0.0
    %764 = vmatpush2.xpose.msra.mxu0 0.0
    %765 = vmatprep.subr.mxu0 0.0
    %766 = vmatpush2.xpose.msra.mxu0 0.0
    %767 = vmatprep.subr.mxu0 0.0
    %768 = vmatpush2.xpose.msra.mxu0 0.0
    %769 = vmatprep.subr.mxu0 0.0
    %770 = vmatpush2.xpose.msra.mxu0 0.0
    %771 = vmatprep.subr.mxu0 0.0
    %772 = vmatpush2.xpose.msra.mxu0 0.0
    %773 = vmatprep.subr.mxu0 0.0
    %774 = vmatpush2.xpose.msra.mxu0 0.0
    %775 = vmatprep.subr.mxu0 0.0
    %776 = vmatpush2.xpose.msra.mxu0 0.0
    %777 = vmatprep.subr.mxu0 0.0
    %778 = vmatpush2.xpose.msra.mxu0 0.0
    %779 = vmatprep.subr.mxu0 0.0
    %780 = vmatpush2.xpose.msra.mxu0 0.0
    %781 = vmatprep.subr.mxu0 0.0
    %782 = vmatpush2.xpose.msra.mxu0 0.0
    %783 = vmatprep.subr.mxu0 0.0
    %784 = vmatpush2.xpose.msra.mxu0 0.0
    %785 = vmatprep.subr.mxu0 0.0
    %786 = vmatpush2.xpose.msra.mxu0 0.0
    %787 = vmatprep.subr.mxu0 0.0
    %788 = vmatpush2.xpose.msra.mxu0 0.0
    %789 = vmatprep.subr.mxu0 0.0
    %790 = vmatpush2.xpose.msra.mxu0 0.0
    %791 = vmatprep.mubr.f32.mxu0 0.0
    %792 = vmatmul.mubr.f32.gmra.mxu0 %v723
    %v793 = vpop.f32.mrf.mxu0
    %v794 = vadd.f32 0.0, %v793
    %v795 = vpop.f32.mrf.mxu0
    %796 = vdwg.mxu0
    %797 = vrot.lane.b32.xlu0 %v46, 112
    %v798 = vpop.permute.xlu0 %797
    %799 = vrot.lane.b32.xlu0 %v49, 112
    %v800 = vpop.permute.xlu0 %799
    %v801 = vsel %vm60, %v798, 0
    %v803 = vsel %vm60, %v800, 0
    %805 = vmatprep.subr.mxu0 0.0
    %806 = vmatpush1.xpose.msra.mxu0 0.0
    %807 = vmatprep.subr.mxu0 0.0
    %808 = vmatpush1.xpose.msra.mxu0 0.0
    %809 = vmatprep.subr.mxu0 0.0
    %810 = vmatpush1.xpose.msra.mxu0 0.0
    %811 = vmatprep.subr.mxu0 0.0
    %812 = vmatpush1.xpose.msra.mxu0 0.0
    %813 = vmatprep.subr.mxu0 0.0
    %814 = vmatpush1.xpose.msra.mxu0 0.0
    %815 = vmatprep.subr.mxu0 0.0
    %816 = vmatpush1.xpose.msra.mxu0 0.0
    %817 = vmatprep.subr.mxu0 0.0
    %818 = vmatpush1.xpose.msra.mxu0 0.0
    %819 = vmatprep.subr.mxu0 0.0
    %820 = vmatpush1.xpose.msra.mxu0 0.0
    %821 = vmatprep.subr.mxu0 0.0
    %822 = vmatpush1.xpose.msra.mxu0 0.0
    %823 = vmatprep.subr.mxu0 0.0
    %824 = vmatpush1.xpose.msra.mxu0 0.0
    %825 = vmatprep.subr.mxu0 0.0
    %826 = vmatpush1.xpose.msra.mxu0 0.0
    %827 = vmatprep.subr.mxu0 0.0
    %828 = vmatpush1.xpose.msra.mxu0 0.0
    %829 = vmatprep.subr.mxu0 0.0
    %830 = vmatpush1.xpose.msra.mxu0 0.0
    %831 = vmatprep.subr.mxu0 0.0
    %832 = vmatpush1.xpose.msra.mxu0 0.0
    %833 = vmatprep.subr.mxu0 0.0
    %834 = vmatpush1.xpose.msra.mxu0 0.0
    %835 = vmatprep.subr.mxu0 0.0
    %836 = vmatpush1.xpose.msra.mxu0 %v803
    %837 = vmatprep.subr.mxu0 0.0
    %838 = vmatpush2.xpose.msra.mxu0 0.0
    %839 = vmatprep.subr.mxu0 0.0
    %840 = vmatpush2.xpose.msra.mxu0 0.0
    %841 = vmatprep.subr.mxu0 0.0
    %842 = vmatpush2.xpose.msra.mxu0 0.0
    %843 = vmatprep.subr.mxu0 0.0
    %844 = vmatpush2.xpose.msra.mxu0 0.0
    %845 = vmatprep.subr.mxu0 0.0
    %846 = vmatpush2.xpose.msra.mxu0 0.0
    %847 = vmatprep.subr.mxu0 0.0
    %848 = vmatpush2.xpose.msra.mxu0 0.0
    %849 = vmatprep.subr.mxu0 0.0
    %850 = vmatpush2.xpose.msra.mxu0 0.0
    %851 = vmatprep.subr.mxu0 0.0
    %852 = vmatpush2.xpose.msra.mxu0 0.0
    %853 = vmatprep.subr.mxu0 0.0
    %854 = vmatpush2.xpose.msra.mxu0 0.0
    %855 = vmatprep.subr.mxu0 0.0
    %856 = vmatpush2.xpose.msra.mxu0 0.0
    %857 = vmatprep.subr.mxu0 0.0
    %858 = vmatpush2.xpose.msra.mxu0 0.0
    %859 = vmatprep.subr.mxu0 0.0
    %860 = vmatpush2.xpose.msra.mxu0 0.0
    %861 = vmatprep.subr.mxu0 0.0
    %862 = vmatpush2.xpose.msra.mxu0 0.0
    %863 = vmatprep.subr.mxu0 0.0
    %864 = vmatpush2.xpose.msra.mxu0 0.0
    %865 = vmatprep.subr.mxu0 0.0
    %866 = vmatpush2.xpose.msra.mxu0 0.0
    %867 = vmatprep.subr.mxu0 0.0
    %868 = vmatpush2.xpose.msra.mxu0 0.0
    %869 = vmatprep.mubr.f32.mxu0 0.0
    %870 = vmatmul.mubr.f32.gmra.mxu0 %v801
    %v871 = vpop.f32.mrf.mxu0
    %v872 = vadd.f32 0.0, %v871
    %v873 = vpop.f32.mrf.mxu0
    %874 = vdwg.mxu0
    %v875 = vsel %vm214, -1000000.0, %v794
    %v876 = vsel %vm214, -1000000.0, %v872
    %v877 = vsel %vm60, %v875, -inf
    %878 = vmax.xlane.f32.xlu0 %v877
    %v879 = vpop.xlane.xlu0 %878
    %v880 = vsel %vm60, %v876, -inf
    %881 = vmax.xlane.f32.xlu0 %v880
    %v882 = vpop.xlane.xlu0 %881
    %v883 = vsub.f32 %v875, %v879
    %v884 = vsub.f32 %v876, %v882
    %v885 = vmul.f32 %v883, 1.442695
    %v886 = vpow.pop %v885
    %v887 = vmul.f32 %v884, 1.442695
    %v888 = vpow.pop %v887
    %v889 = vsel %vm60, %v886, 0.0
    %890 = vadd.xlane.f32.xlu0 %v889
    %v891 = vpop.xlane.xlu0 %890
    %v892 = vsel %vm60, %v888, 0.0
    %893 = vadd.xlane.f32.xlu0 %v892
    %v894 = vpop.xlane.xlu0 %893
    %v895 = vrcp.pop %v891
    %v896 = vrcp.pop %v894
    %v897 = vmul.f32 %v886, %v895
    %v898 = vmul.f32 %v888, %v896
    %899 = vrot.lane.b32.xlu0 %v51, 112
    %v900 = vpop.permute.xlu0 %899
    %v903 = vsel %vm60, %v897, 0
    %905 = vmatprep.subr.mxu0 0.0
    %906 = vmatpush1.msra.mxu0 0.0
    %907 = vmatprep.subr.mxu0 0.0
    %908 = vmatpush1.msra.mxu0 0.0
    %909 = vmatprep.subr.mxu0 0.0
    %910 = vmatpush1.msra.mxu0 0.0
    %911 = vmatprep.subr.mxu0 0.0
    %912 = vmatpush1.msra.mxu0 0.0
    %913 = vmatprep.subr.mxu0 0.0
    %914 = vmatpush1.msra.mxu0 0.0
    %915 = vmatprep.subr.mxu0 0.0
    %916 = vmatpush1.msra.mxu0 0.0
    %917 = vmatprep.subr.mxu0 0.0
    %918 = vmatpush1.msra.mxu0 0.0
    %919 = vmatprep.subr.mxu0 0.0
    %920 = vmatpush1.msra.mxu0 0.0
    %921 = vmatprep.subr.mxu0 0.0
    %922 = vmatpush1.msra.mxu0 0.0
    %923 = vmatprep.subr.mxu0 0.0
    %924 = vmatpush1.msra.mxu0 0.0
    %925 = vmatprep.subr.mxu0 0.0
    %926 = vmatpush1.msra.mxu0 0.0
    %927 = vmatprep.subr.mxu0 0.0
    %928 = vmatpush1.msra.mxu0 0.0
    %929 = vmatprep.subr.mxu0 0.0
    %930 = vmatpush1.msra.mxu0 0.0
    %931 = vmatprep.subr.mxu0 0.0
    %932 = vmatpush1.msra.mxu0 0.0
    %933 = vmatprep.subr.mxu0 0.0
    %934 = vmatpush1.msra.mxu0 0.0
    %935 = vmatprep.subr.mxu0 0.0
    %936 = vmatpush1.msra.mxu0 %v900
    %937 = vmatprep.subr.mxu0 0.0
    %938 = vmatpush2.msra.mxu0 0.0
    %939 = vmatprep.subr.mxu0 0.0
    %940 = vmatpush2.msra.mxu0 0.0
    %941 = vmatprep.subr.mxu0 0.0
    %942 = vmatpush2.msra.mxu0 0.0
    %943 = vmatprep.subr.mxu0 0.0
    %944 = vmatpush2.msra.mxu0 0.0
    %945 = vmatprep.subr.mxu0 0.0
    %946 = vmatpush2.msra.mxu0 0.0
    %947 = vmatprep.subr.mxu0 0.0
    %948 = vmatpush2.msra.mxu0 0.0
    %949 = vmatprep.subr.mxu0 0.0
    %950 = vmatpush2.msra.mxu0 0.0
    %951 = vmatprep.subr.mxu0 0.0
    %952 = vmatpush2.msra.mxu0 0.0
    %953 = vmatprep.subr.mxu0 0.0
    %954 = vmatpush2.msra.mxu0 0.0
    %955 = vmatprep.subr.mxu0 0.0
    %956 = vmatpush2.msra.mxu0 0.0
    %957 = vmatprep.subr.mxu0 0.0
    %958 = vmatpush2.msra.mxu0 0.0
    %959 = vmatprep.subr.mxu0 0.0
    %960 = vmatpush2.msra.mxu0 0.0
    %961 = vmatprep.subr.mxu0 0.0
    %962 = vmatpush2.msra.mxu0 0.0
    %963 = vmatprep.subr.mxu0 0.0
    %964 = vmatpush2.msra.mxu0 0.0
    %965 = vmatprep.subr.mxu0 0.0
    %966 = vmatpush2.msra.mxu0 0.0
    %967 = vmatprep.subr.mxu0 0.0
    %968 = vmatpush2.msra.mxu0 0.0
    %969 = vmatprep.mubr.f32.mxu0 0.0
    %970 = vmatmul.mubr.f32.gmra.mxu0 %v903
    %v971 = vpop.f32.mrf.mxu0
    %v972 = vadd.f32 0.0, %v971
    %v973 = vpop.f32.mrf.mxu0
    %974 = vdwg.mxu0
    %975 = vrot.lane.b32.xlu0 %v52, 112
    %v976 = vpop.permute.xlu0 %975
    %v979 = vsel %vm60, %v898, 0
    %981 = vmatprep.subr.mxu0 0.0
    %982 = vmatpush1.msra.mxu0 0.0
    %983 = vmatprep.subr.mxu0 0.0
    %984 = vmatpush1.msra.mxu0 0.0
    %985 = vmatprep.subr.mxu0 0.0
    %986 = vmatpush1.msra.mxu0 0.0
    %987 = vmatprep.subr.mxu0 0.0
    %988 = vmatpush1.msra.mxu0 0.0
    %989 = vmatprep.subr.mxu0 0.0
    %990 = vmatpush1.msra.mxu0 0.0
    %991 = vmatprep.subr.mxu0 0.0
    %992 = vmatpush1.msra.mxu0 0.0
    %993 = vmatprep.subr.mxu0 0.0
    %994 = vmatpush1.msra.mxu0 0.0
    %995 = vmatprep.subr.mxu0 0.0
    %996 = vmatpush1.msra.mxu0 0.0
    %997 = vmatprep.subr.mxu0 0.0
    %998 = vmatpush1.msra.mxu0 0.0
    %999 = vmatprep.subr.mxu0 0.0
    %1000 = vmatpush1.msra.mxu0 0.0
    %1001 = vmatprep.subr.mxu0 0.0
    %1002 = vmatpush1.msra.mxu0 0.0
    %1003 = vmatprep.subr.mxu0 0.0
    %1004 = vmatpush1.msra.mxu0 0.0
    %1005 = vmatprep.subr.mxu0 0.0
    %1006 = vmatpush1.msra.mxu0 0.0
    %1007 = vmatprep.subr.mxu0 0.0
    %1008 = vmatpush1.msra.mxu0 0.0
    %1009 = vmatprep.subr.mxu0 0.0
    %1010 = vmatpush1.msra.mxu0 0.0
    %1011 = vmatprep.subr.mxu0 0.0
    %1012 = vmatpush1.msra.mxu0 %v976
    %1013 = vmatprep.subr.mxu0 0.0
    %1014 = vmatpush2.msra.mxu0 0.0
    %1015 = vmatprep.subr.mxu0 0.0
    %1016 = vmatpush2.msra.mxu0 0.0
    %1017 = vmatprep.subr.mxu0 0.0
    %1018 = vmatpush2.msra.mxu0 0.0
    %1019 = vmatprep.subr.mxu0 0.0
    %1020 = vmatpush2.msra.mxu0 0.0
    %1021 = vmatprep.subr.mxu0 0.0
    %1022 = vmatpush2.msra.mxu0 0.0
    %1023 = vmatprep.subr.mxu0 0.0
    %1024 = vmatpush2.msra.mxu0 0.0
    %1025 = vmatprep.subr.mxu0 0.0
    %1026 = vmatpush2.msra.mxu0 0.0
    %1027 = vmatprep.subr.mxu0 0.0
    %1028 = vmatpush2.msra.mxu0 0.0
    %1029 = vmatprep.subr.mxu0 0.0
    %1030 = vmatpush2.msra.mxu0 0.0
    %1031 = vmatprep.subr.mxu0 0.0
    %1032 = vmatpush2.msra.mxu0 0.0
    %1033 = vmatprep.subr.mxu0 0.0
    %1034 = vmatpush2.msra.mxu0 0.0
    %1035 = vmatprep.subr.mxu0 0.0
    %1036 = vmatpush2.msra.mxu0 0.0
    %1037 = vmatprep.subr.mxu0 0.0
    %1038 = vmatpush2.msra.mxu0 0.0
    %1039 = vmatprep.subr.mxu0 0.0
    %1040 = vmatpush2.msra.mxu0 0.0
    %1041 = vmatprep.subr.mxu0 0.0
    %1042 = vmatpush2.msra.mxu0 0.0
    %1043 = vmatprep.subr.mxu0 0.0
    %1044 = vmatpush2.msra.mxu0 0.0
    %1045 = vmatprep.mubr.f32.mxu0 0.0
    %1046 = vmatmul.mubr.f32.gmra.mxu0 %v979
    %v1047 = vpop.f32.mrf.mxu0
    %v1048 = vadd.f32 0.0, %v1047
    %v1049 = vpop.f32.mrf.mxu0
    %1050 = vdwg.mxu0
    %1051 = vrot.lane.b32.xlu0 %v45, 104
    %v1052 = vpop.permute.xlu0 %1051
    %1053 = vrot.lane.b32.xlu0 %v48, 104
    %v1054 = vpop.permute.xlu0 %1053
    %v1055 = vsel %vm60, %v1052, 0
    %v1057 = vsel %vm60, %v1054, 0
    %1059 = vmatprep.subr.mxu0 0.0
    %1060 = vmatpush1.xpose.msra.mxu0 0.0
    %1061 = vmatprep.subr.mxu0 0.0
    %1062 = vmatpush1.xpose.msra.mxu0 0.0
    %1063 = vmatprep.subr.mxu0 0.0
    %1064 = vmatpush1.xpose.msra.mxu0 0.0
    %1065 = vmatprep.subr.mxu0 0.0
    %1066 = vmatpush1.xpose.msra.mxu0 0.0
    %1067 = vmatprep.subr.mxu0 0.0
    %1068 = vmatpush1.xpose.msra.mxu0 0.0
    %1069 = vmatprep.subr.mxu0 0.0
    %1070 = vmatpush1.xpose.msra.mxu0 0.0
    %1071 = vmatprep.subr.mxu0 0.0
    %1072 = vmatpush1.xpose.msra.mxu0 0.0
    %1073 = vmatprep.subr.mxu0 0.0
    %1074 = vmatpush1.xpose.msra.mxu0 0.0
    %1075 = vmatprep.subr.mxu0 0.0
    %1076 = vmatpush1.xpose.msra.mxu0 0.0
    %1077 = vmatprep.subr.mxu0 0.0
    %1078 = vmatpush1.xpose.msra.mxu0 0.0
    %1079 = vmatprep.subr.mxu0 0.0
    %1080 = vmatpush1.xpose.msra.mxu0 0.0
    %1081 = vmatprep.subr.mxu0 0.0
    %1082 = vmatpush1.xpose.msra.mxu0 0.0
    %1083 = vmatprep.subr.mxu0 0.0
    %1084 = vmatpush1.xpose.msra.mxu0 0.0
    %1085 = vmatprep.subr.mxu0 0.0
    %1086 = vmatpush1.xpose.msra.mxu0 0.0
    %1087 = vmatprep.subr.mxu0 0.0
    %1088 = vmatpush1.xpose.msra.mxu0 0.0
    %1089 = vmatprep.subr.mxu0 0.0
    %1090 = vmatpush1.xpose.msra.mxu0 %v1057
    %1091 = vmatprep.subr.mxu0 0.0
    %1092 = vmatpush2.xpose.msra.mxu0 0.0
    %1093 = vmatprep.subr.mxu0 0.0
    %1094 = vmatpush2.xpose.msra.mxu0 0.0
    %1095 = vmatprep.subr.mxu0 0.0
    %1096 = vmatpush2.xpose.msra.mxu0 0.0
    %1097 = vmatprep.subr.mxu0 0.0
    %1098 = vmatpush2.xpose.msra.mxu0 0.0
    %1099 = vmatprep.subr.mxu0 0.0
    %1100 = vmatpush2.xpose.msra.mxu0 0.0
    %1101 = vmatprep.subr.mxu0 0.0
    %1102 = vmatpush2.xpose.msra.mxu0 0.0
    %1103 = vmatprep.subr.mxu0 0.0
    %1104 = vmatpush2.xpose.msra.mxu0 0.0
    %1105 = vmatprep.subr.mxu0 0.0
    %1106 = vmatpush2.xpose.msra.mxu0 0.0
    %1107 = vmatprep.subr.mxu0 0.0
    %1108 = vmatpush2.xpose.msra.mxu0 0.0
    %1109 = vmatprep.subr.mxu0 0.0
    %1110 = vmatpush2.xpose.msra.mxu0 0.0
    %1111 = vmatprep.subr.mxu0 0.0
    %1112 = vmatpush2.xpose.msra.mxu0 0.0
    %1113 = vmatprep.subr.mxu0 0.0
    %1114 = vmatpush2.xpose.msra.mxu0 0.0
    %1115 = vmatprep.subr.mxu0 0.0
    %1116 = vmatpush2.xpose.msra.mxu0 0.0
    %1117 = vmatprep.subr.mxu0 0.0
    %1118 = vmatpush2.xpose.msra.mxu0 0.0
    %1119 = vmatprep.subr.mxu0 0.0
    %1120 = vmatpush2.xpose.msra.mxu0 0.0
    %1121 = vmatprep.subr.mxu0 0.0
    %1122 = vmatpush2.xpose.msra.mxu0 0.0
    %1123 = vmatprep.mubr.f32.mxu0 0.0
    %1124 = vmatmul.mubr.f32.gmra.mxu0 %v1055
    %v1125 = vpop.f32.mrf.mxu0
    %v1126 = vadd.f32 0.0, %v1125
    %v1127 = vpop.f32.mrf.mxu0
    %1128 = vdwg.mxu0
    %1129 = vrot.lane.b32.xlu0 %v46, 104
    %v1130 = vpop.permute.xlu0 %1129
    %1131 = vrot.lane.b32.xlu0 %v49, 104
    %v1132 = vpop.permute.xlu0 %1131
    %v1133 = vsel %vm60, %v1130, 0
    %v1135 = vsel %vm60, %v1132, 0
    %1137 = vmatprep.subr.mxu0 0.0
    %1138 = vmatpush1.xpose.msra.mxu0 0.0
    %1139 = vmatprep.subr.mxu0 0.0
    %1140 = vmatpush1.xpose.msra.mxu0 0.0
    %1141 = vmatprep.subr.mxu0 0.0
    %1142 = vmatpush1.xpose.msra.mxu0 0.0
    %1143 = vmatprep.subr.mxu0 0.0
    %1144 = vmatpush1.xpose.msra.mxu0 0.0
    %1145 = vmatprep.subr.mxu0 0.0
    %1146 = vmatpush1.xpose.msra.mxu0 0.0
    %1147 = vmatprep.subr.mxu0 0.0
    %1148 = vmatpush1.xpose.msra.mxu0 0.0
    %1149 = vmatprep.subr.mxu0 0.0
    %1150 = vmatpush1.xpose.msra.mxu0 0.0
    %1151 = vmatprep.subr.mxu0 0.0
    %1152 = vmatpush1.xpose.msra.mxu0 0.0
    %1153 = vmatprep.subr.mxu0 0.0
    %1154 = vmatpush1.xpose.msra.mxu0 0.0
    %1155 = vmatprep.subr.mxu0 0.0
    %1156 = vmatpush1.xpose.msra.mxu0 0.0
    %1157 = vmatprep.subr.mxu0 0.0
    %1158 = vmatpush1.xpose.msra.mxu0 0.0
    %1159 = vmatprep.subr.mxu0 0.0
    %1160 = vmatpush1.xpose.msra.mxu0 0.0
    %1161 = vmatprep.subr.mxu0 0.0
    %1162 = vmatpush1.xpose.msra.mxu0 0.0
    %1163 = vmatprep.subr.mxu0 0.0
    %1164 = vmatpush1.xpose.msra.mxu0 0.0
    %1165 = vmatprep.subr.mxu0 0.0
    %1166 = vmatpush1.xpose.msra.mxu0 0.0
    %1167 = vmatprep.subr.mxu0 0.0
    %1168 = vmatpush1.xpose.msra.mxu0 %v1135
    %1169 = vmatprep.subr.mxu0 0.0
    %1170 = vmatpush2.xpose.msra.mxu0 0.0
    %1171 = vmatprep.subr.mxu0 0.0
    %1172 = vmatpush2.xpose.msra.mxu0 0.0
    %1173 = vmatprep.subr.mxu0 0.0
    %1174 = vmatpush2.xpose.msra.mxu0 0.0
    %1175 = vmatprep.subr.mxu0 0.0
    %1176 = vmatpush2.xpose.msra.mxu0 0.0
    %1177 = vmatprep.subr.mxu0 0.0
    %1178 = vmatpush2.xpose.msra.mxu0 0.0
    %1179 = vmatprep.subr.mxu0 0.0
    %1180 = vmatpush2.xpose.msra.mxu0 0.0
    %1181 = vmatprep.subr.mxu0 0.0
    %1182 = vmatpush2.xpose.msra.mxu0 0.0
    %1183 = vmatprep.subr.mxu0 0.0
    %1184 = vmatpush2.xpose.msra.mxu0 0.0
    %1185 = vmatprep.subr.mxu0 0.0
    %1186 = vmatpush2.xpose.msra.mxu0 0.0
    %1187 = vmatprep.subr.mxu0 0.0
    %1188 = vmatpush2.xpose.msra.mxu0 0.0
    %1189 = vmatprep.subr.mxu0 0.0
    %1190 = vmatpush2.xpose.msra.mxu0 0.0
    %1191 = vmatprep.subr.mxu0 0.0
    %1192 = vmatpush2.xpose.msra.mxu0 0.0
    %1193 = vmatprep.subr.mxu0 0.0
    %1194 = vmatpush2.xpose.msra.mxu0 0.0
    %1195 = vmatprep.subr.mxu0 0.0
    %1196 = vmatpush2.xpose.msra.mxu0 0.0
    %1197 = vmatprep.subr.mxu0 0.0
    %1198 = vmatpush2.xpose.msra.mxu0 0.0
    %1199 = vmatprep.subr.mxu0 0.0
    %1200 = vmatpush2.xpose.msra.mxu0 0.0
    %1201 = vmatprep.mubr.f32.mxu0 0.0
    %1202 = vmatmul.mubr.f32.gmra.mxu0 %v1133
    %v1203 = vpop.f32.mrf.mxu0
    %v1204 = vadd.f32 0.0, %v1203
    %v1205 = vpop.f32.mrf.mxu0
    %1206 = vdwg.mxu0
    %v1207 = vsel %vm214, -1000000.0, %v1126
    %v1208 = vsel %vm214, -1000000.0, %v1204
    %v1209 = vsel %vm60, %v1207, -inf
    %1210 = vmax.xlane.f32.xlu0 %v1209
    %v1211 = vpop.xlane.xlu0 %1210
    %v1212 = vsel %vm60, %v1208, -inf
    %1213 = vmax.xlane.f32.xlu0 %v1212
    %v1214 = vpop.xlane.xlu0 %1213
    %v1215 = vsub.f32 %v1207, %v1211
    %v1216 = vsub.f32 %v1208, %v1214
    %v1217 = vmul.f32 %v1215, 1.442695
    %v1218 = vpow.pop %v1217
    %v1219 = vmul.f32 %v1216, 1.442695
    %v1220 = vpow.pop %v1219
    %v1221 = vsel %vm60, %v1218, 0.0
    %1222 = vadd.xlane.f32.xlu0 %v1221
    %v1223 = vpop.xlane.xlu0 %1222
    %v1224 = vsel %vm60, %v1220, 0.0
    %1225 = vadd.xlane.f32.xlu0 %v1224
    %v1226 = vpop.xlane.xlu0 %1225
    %v1227 = vrcp.pop %v1223
    %v1228 = vrcp.pop %v1226
    %v1229 = vmul.f32 %v1218, %v1227
    %v1230 = vmul.f32 %v1220, %v1228
    %1231 = vrot.lane.b32.xlu0 %v51, 104
    %v1232 = vpop.permute.xlu0 %1231
    %v1235 = vsel %vm60, %v1229, 0
    %1237 = vmatprep.subr.mxu0 0.0
    %1238 = vmatpush1.msra.mxu0 0.0
    %1239 = vmatprep.subr.mxu0 0.0
    %1240 = vmatpush1.msra.mxu0 0.0
    %1241 = vmatprep.subr.mxu0 0.0
    %1242 = vmatpush1.msra.mxu0 0.0
    %1243 = vmatprep.subr.mxu0 0.0
    %1244 = vmatpush1.msra.mxu0 0.0
    %1245 = vmatprep.subr.mxu0 0.0
    %1246 = vmatpush1.msra.mxu0 0.0
    %1247 = vmatprep.subr.mxu0 0.0
    %1248 = vmatpush1.msra.mxu0 0.0
    %1249 = vmatprep.subr.mxu0 0.0
    %1250 = vmatpush1.msra.mxu0 0.0
    %1251 = vmatprep.subr.mxu0 0.0
    %1252 = vmatpush1.msra.mxu0 0.0
    %1253 = vmatprep.subr.mxu0 0.0
    %1254 = vmatpush1.msra.mxu0 0.0
    %1255 = vmatprep.subr.mxu0 0.0
    %1256 = vmatpush1.msra.mxu0 0.0
    %1257 = vmatprep.subr.mxu0 0.0
    %1258 = vmatpush1.msra.mxu0 0.0
    %1259 = vmatprep.subr.mxu0 0.0
    %1260 = vmatpush1.msra.mxu0 0.0
    %1261 = vmatprep.subr.mxu0 0.0
    %1262 = vmatpush1.msra.mxu0 0.0
    %1263 = vmatprep.subr.mxu0 0.0
    %1264 = vmatpush1.msra.mxu0 0.0
    %1265 = vmatprep.subr.mxu0 0.0
    %1266 = vmatpush1.msra.mxu0 0.0
    %1267 = vmatprep.subr.mxu0 0.0
    %1268 = vmatpush1.msra.mxu0 %v1232
    %1269 = vmatprep.subr.mxu0 0.0
    %1270 = vmatpush2.msra.mxu0 0.0
    %1271 = vmatprep.subr.mxu0 0.0
    %1272 = vmatpush2.msra.mxu0 0.0
    %1273 = vmatprep.subr.mxu0 0.0
    %1274 = vmatpush2.msra.mxu0 0.0
    %1275 = vmatprep.subr.mxu0 0.0
    %1276 = vmatpush2.msra.mxu0 0.0
    %1277 = vmatprep.subr.mxu0 0.0
    %1278 = vmatpush2.msra.mxu0 0.0
    %1279 = vmatprep.subr.mxu0 0.0
    %1280 = vmatpush2.msra.mxu0 0.0
    %1281 = vmatprep.subr.mxu0 0.0
    %1282 = vmatpush2.msra.mxu0 0.0
    %1283 = vmatprep.subr.mxu0 0.0
    %1284 = vmatpush2.msra.mxu0 0.0
    %1285 = vmatprep.subr.mxu0 0.0
    %1286 = vmatpush2.msra.mxu0 0.0
    %1287 = vmatprep.subr.mxu0 0.0
    %1288 = vmatpush2.msra.mxu0 0.0
    %1289 = vmatprep.subr.mxu0 0.0
    %1290 = vmatpush2.msra.mxu0 0.0
    %1291 = vmatprep.subr.mxu0 0.0
    %1292 = vmatpush2.msra.mxu0 0.0
    %1293 = vmatprep.subr.mxu0 0.0
    %1294 = vmatpush2.msra.mxu0 0.0
    %1295 = vmatprep.subr.mxu0 0.0
    %1296 = vmatpush2.msra.mxu0 0.0
    %1297 = vmatprep.subr.mxu0 0.0
    %1298 = vmatpush2.msra.mxu0 0.0
    %1299 = vmatprep.subr.mxu0 0.0
    %1300 = vmatpush2.msra.mxu0 0.0
    %1301 = vmatprep.mubr.f32.mxu0 0.0
    %1302 = vmatmul.mubr.f32.gmra.mxu0 %v1235
    %v1303 = vpop.f32.mrf.mxu0
    %v1304 = vadd.f32 0.0, %v1303
    %v1305 = vpop.f32.mrf.mxu0
    %1306 = vdwg.mxu0
    %1307 = vrot.lane.b32.xlu0 %v52, 104
    %v1308 = vpop.permute.xlu0 %1307
    %v1311 = vsel %vm60, %v1230, 0
    %1313 = vmatprep.subr.mxu0 0.0
    %1314 = vmatpush1.msra.mxu0 0.0
    %1315 = vmatprep.subr.mxu0 0.0
    %1316 = vmatpush1.msra.mxu0 0.0
    %1317 = vmatprep.subr.mxu0 0.0
    %1318 = vmatpush1.msra.mxu0 0.0
    %1319 = vmatprep.subr.mxu0 0.0
    %1320 = vmatpush1.msra.mxu0 0.0
    %1321 = vmatprep.subr.mxu0 0.0
    %1322 = vmatpush1.msra.mxu0 0.0
    %1323 = vmatprep.subr.mxu0 0.0
    %1324 = vmatpush1.msra.mxu0 0.0
    %1325 = vmatprep.subr.mxu0 0.0
    %1326 = vmatpush1.msra.mxu0 0.0
    %1327 = vmatprep.subr.mxu0 0.0
    %1328 = vmatpush1.msra.mxu0 0.0
    %1329 = vmatprep.subr.mxu0 0.0
    %1330 = vmatpush1.msra.mxu0 0.0
    %1331 = vmatprep.subr.mxu0 0.0
    %1332 = vmatpush1.msra.mxu0 0.0
    %1333 = vmatprep.subr.mxu0 0.0
    %1334 = vmatpush1.msra.mxu0 0.0
    %1335 = vmatprep.subr.mxu0 0.0
    %1336 = vmatpush1.msra.mxu0 0.0
    %1337 = vmatprep.subr.mxu0 0.0
    %1338 = vmatpush1.msra.mxu0 0.0
    %1339 = vmatprep.subr.mxu0 0.0
    %1340 = vmatpush1.msra.mxu0 0.0
    %1341 = vmatprep.subr.mxu0 0.0
    %1342 = vmatpush1.msra.mxu0 0.0
    %1343 = vmatprep.subr.mxu0 0.0
    %1344 = vmatpush1.msra.mxu0 %v1308
    %1345 = vmatprep.subr.mxu0 0.0
    %1346 = vmatpush2.msra.mxu0 0.0
    %1347 = vmatprep.subr.mxu0 0.0
    %1348 = vmatpush2.msra.mxu0 0.0
    %1349 = vmatprep.subr.mxu0 0.0
    %1350 = vmatpush2.msra.mxu0 0.0
    %1351 = vmatprep.subr.mxu0 0.0
    %1352 = vmatpush2.msra.mxu0 0.0
    %1353 = vmatprep.subr.mxu0 0.0
    %1354 = vmatpush2.msra.mxu0 0.0
    %1355 = vmatprep.subr.mxu0 0.0
    %1356 = vmatpush2.msra.mxu0 0.0
    %1357 = vmatprep.subr.mxu0 0.0
    %1358 = vmatpush2.msra.mxu0 0.0
    %1359 = vmatprep.subr.mxu0 0.0
    %1360 = vmatpush2.msra.mxu0 0.0
    %1361 = vmatprep.subr.mxu0 0.0
    %1362 = vmatpush2.msra.mxu0 0.0
    %1363 = vmatprep.subr.mxu0 0.0
    %1364 = vmatpush2.msra.mxu0 0.0
    %1365 = vmatprep.subr.mxu0 0.0
    %1366 = vmatpush2.msra.mxu0 0.0
    %1367 = vmatprep.subr.mxu0 0.0
    %1368 = vmatpush2.msra.mxu0 0.0
    %1369 = vmatprep.subr.mxu0 0.0
    %1370 = vmatpush2.msra.mxu0 0.0
    %1371 = vmatprep.subr.mxu0 0.0
    %1372 = vmatpush2.msra.mxu0 0.0
    %1373 = vmatprep.subr.mxu0 0.0
    %1374 = vmatpush2.msra.mxu0 0.0
    %1375 = vmatprep.subr.mxu0 0.0
    %1376 = vmatpush2.msra.mxu0 0.0
    %1377 = vmatprep.mubr.f32.mxu0 0.0
    %1378 = vmatmul.mubr.f32.gmra.mxu0 %v1311
    %v1379 = vpop.f32.mrf.mxu0
    %v1380 = vadd.f32 0.0, %v1379
    %v1381 = vpop.f32.mrf.mxu0
    %1382 = vdwg.mxu0
    %1385 = vrot.lane.b32.xlu0 %v639, 8
    %v1386 = vpop.permute.xlu0 %1385
    %1387 = vrot.lane.b32.xlu0 %v716, 8
    %v1388 = vpop.permute.xlu0 %1387
    %1393 = vrot.lane.b32.xlu0 %v972, 16
    %v1394 = vpop.permute.xlu0 %1393
    %1395 = vrot.lane.b32.xlu0 %v1048, 16
    %v1396 = vpop.permute.xlu0 %1395
    %1401 = vrot.lane.b32.xlu0 %v1304, 24
    %v1402 = vpop.permute.xlu0 %1401
    %1403 = vrot.lane.b32.xlu0 %v1380, 24
    %v1404 = vpop.permute.xlu0 %1403
    %v1407 = vsel %vm60, %v309, %v1386
    %v1408 = vsel %vm60, %v382, %v1388
    %vm1409 = vcmask 130048
    %v1410 = vsel %vm1409, %v1407, %v1394
    %v1411 = vsel %vm1409, %v1408, %v1396
    %vm1412 = vcmask 195584
    %v1413 = vsel %vm1412, %v1410, %v1402
    %v1414 = vsel %vm1412, %v1411, %v1404
    %v1415 = vld [vmem:[%s2] sm:$0x1]
    %v1417 = vlaneseq
    %v1418 = vshrl.u32 %v1417, 7
    %v1419 = vsub.s32 0, %v1418
    %v1420 = vrot.slane %v1415, %v1419
    %vm1422 = vcmask 261120
    %v1424 = vsel %vm1422, %v1413, 0
    %v1427 = vsel %vm1422, %v1414, 0
    %1429 = vmatprep.subr.mxu0 0.0
    %1430 = vmatpush1.msra.mxu0 0.0
    %1431 = vmatprep.subr.mxu0 0.0
    %1432 = vmatpush1.msra.mxu0 0.0
    %1433 = vmatprep.subr.mxu0 0.0
    %1434 = vmatpush1.msra.mxu0 0.0
    %1435 = vmatprep.subr.mxu0 0.0
    %1436 = vmatpush1.msra.mxu0 0.0
    %1437 = vmatprep.subr.mxu0 0.0
    %1438 = vmatpush1.msra.mxu0 0.0
    %1439 = vmatprep.subr.mxu0 0.0
    %1440 = vmatpush1.msra.mxu0 0.0
    %1441 = vmatprep.subr.mxu0 0.0
    %1442 = vmatpush1.msra.mxu0 0.0
    %1443 = vmatprep.subr.mxu0 0.0
    %1444 = vmatpush1.msra.mxu0 0.0
    %1445 = vmatprep.subr.mxu0 0.0
    %1446 = vmatpush1.msra.mxu0 0.0
    %1447 = vmatprep.subr.mxu0 0.0
    %1448 = vmatpush1.msra.mxu0 0.0
    %1449 = vmatprep.subr.mxu0 0.0
    %1450 = vmatpush1.msra.mxu0 0.0
    %1451 = vmatprep.subr.mxu0 0.0
    %1452 = vmatpush1.msra.mxu0 0.0
    %1453 = vmatprep.subr.mxu0 0.0
    %1454 = vmatpush1.msra.mxu0 %v56
    %1455 = vmatprep.subr.mxu0 0.0
    %1456 = vmatpush1.msra.mxu0 %v55
    %1457 = vmatprep.subr.mxu0 0.0
    %1458 = vmatpush1.msra.mxu0 %v54
    %1459 = vmatprep.subr.mxu0 0.0
    %1460 = vmatpush1.msra.mxu0 %v53
    %1461 = vmatprep.subr.mxu0 0.0
    %1462 = vmatpush2.msra.mxu0 0.0
    %1463 = vmatprep.subr.mxu0 0.0
    %1464 = vmatpush2.msra.mxu0 0.0
    %1465 = vmatprep.subr.mxu0 0.0
    %1466 = vmatpush2.msra.mxu0 0.0
    %1467 = vmatprep.subr.mxu0 0.0
    %1468 = vmatpush2.msra.mxu0 0.0
    %1469 = vmatprep.subr.mxu0 0.0
    %1470 = vmatpush2.msra.mxu0 0.0
    %1471 = vmatprep.subr.mxu0 0.0
    %1472 = vmatpush2.msra.mxu0 0.0
    %1473 = vmatprep.subr.mxu0 0.0
    %1474 = vmatpush2.msra.mxu0 0.0
    %1475 = vmatprep.subr.mxu0 0.0
    %1476 = vmatpush2.msra.mxu0 0.0
    %1477 = vmatprep.subr.mxu0 0.0
    %1478 = vmatpush2.msra.mxu0 0.0
    %1479 = vmatprep.subr.mxu0 0.0
    %1480 = vmatpush2.msra.mxu0 0.0
    %1481 = vmatprep.subr.mxu0 0.0
    %1482 = vmatpush2.msra.mxu0 0.0
    %1483 = vmatprep.subr.mxu0 0.0
    %1484 = vmatpush2.msra.mxu0 0.0
    %1485 = vmatprep.subr.mxu0 0.0
    %1486 = vmatpush2.msra.mxu0 0.0
    %1487 = vmatprep.subr.mxu0 0.0
    %1488 = vmatpush2.msra.mxu0 0.0
    %1489 = vmatprep.subr.mxu0 0.0
    %1490 = vmatpush2.msra.mxu0 0.0
    %1491 = vmatprep.subr.mxu0 0.0
    %1492 = vmatpush2.msra.mxu0 0.0
    %1493 = vmatprep.mubr.f32.mxu0 0.0
    %1494 = vmatmul.mubr.f32.gmra.mxu0 %v1424
    %v1495 = vpop.f32.mrf.mxu0
    %v1496 = vadd.f32 %v1420, %v1495
    %v1497 = vpop.f32.mrf.mxu0
    %1498 = vmatprep.mubr.f32.mxu0 0.0
    %1499 = vmatmul.mubr.f32.gmra.mxu0 %v1427
    %v1500 = vpop.f32.mrf.mxu0
    %v1501 = vadd.f32 %v1420, %v1500
    %v1502 = vpop.f32.mrf.mxu0
    %1503 = vdwg.mxu0
    %1504 = vst.msk [vmem:[#allocation7] sm:$0xff] %vm1422, %v1496
    %1505 = vst.msk [vmem:[#allocation7 + $0x8] sm:$0xff] %vm1422, %v1501
    // Predicated region
    $region22: #{tpu_custom_call.1} parent=1 // pred_check
      _
    $region23: #{tpu_custom_call.1} parent=1 // pred_check_branch
      %1507 = sbr.rel (0) target = $region25
    $region24: #{tpu_custom_call.1} parent=1 // pred_region
      %s1509 = ssub.s32 256, 256
      %1510 = vsyncadd [#allocation4], %s1509
      %s1511 = sshll.u32 [#allocation7], 4
      %s1512 = int_to_ptr.vmem [resolvable:$true] %s1511
      %1517 = dma.vmem_to_hbm [thread:$0]  %s1512, 256, %s3, [#allocation4], 128, 128, 8
    $region25: #{tpu_custom_call.1} parent=1 // pred_fallthru
      _
    // Predicated region
    $region26: #{tpu_custom_call.1} parent=1 // pred_check
      _
    $region27: #{tpu_custom_call.1} parent=1 // pred_check_branch
      %1519 = sbr.rel (0) target = $region29
    $region28: #{tpu_custom_call.1} parent=1 // pred_region
      %1520 = dma.done [#allocation4], 256
    $region29: #{tpu_custom_call.1} parent=1 // pred_fallthru
      _
    %1521 = vsyncpa [#allocation3], 1
    %1522 = vsyncpa [#allocation6], 1
    %1523 = vsyncpa [#allocation4], 1

</llo_original>
